<compile_context>
chip_gen: v7x
topology: tpu7x:2x2x1
jax: 0.10.0
libtpu: 0.0.40
codegen_flags: <defaults>
</compile_context>

<pallas_src>
import jax
import jax.numpy as jnp
from jax.experimental import pallas as pl
from jax.experimental.pallas import tpu as pltpu

LANE = 128


# ---------------------------------------------------------------------------
# helpers
# ---------------------------------------------------------------------------
def _lane_pad_dim(c):
    # Pad lane-axis channel counts below 128 up to 128 (unmasked stores);
    # leave >=128 channel counts untouched (avoid inflating HBM traffic).
    return LANE if c < LANE else c


def _pad_last(a, target):
    c = a.shape[-1]
    if c == target:
        return a
    pad = [(0, 0)] * (a.ndim - 1) + [(0, target - c)]
    return jnp.pad(a, pad)


def _stable_sigmoid(x):
    # numerically stable logistic (review correctness concern)
    z = jnp.exp(-jnp.abs(x))
    return jnp.where(x >= 0, 1.0 / (1.0 + z), z / (1.0 + z))


def _swish(x):
    return x * _stable_sigmoid(x)


def _vmem_limit():
    # Chip-aware scoped-VMEM limit: ~0.6 * physical, capped at 100 MiB.
    # (v7x -> ~38 MiB, v5e/v6e -> ~77 MiB.)  Falls back to compiler default.
    try:
        cap = pltpu.get_tpu_info().vmem_capacity_bytes
        return min(int(cap * 0.6), 100 * 1024 * 1024)
    except Exception:
        return None


def _pick_row_block(hw, cap=1024):
    """Largest multiple-of-8 divisor of hw that is <= cap (no padding needed)."""
    if hw <= cap:
        return hw
    best = None
    for d in range(8, cap + 1, 8):
        if hw % d == 0:
            best = d
    return best if best is not None else hw


# ---------------------------------------------------------------------------
# Kernel A: fused [1x1 expand conv + BN1 + Swish] + depthwise conv + BN2 +
#           Swish, plus the SE pooled sum.  One batch element per grid step.
# ---------------------------------------------------------------------------
def _make_expand_dw_kernel(has_expand, H, W, k, pt, cdt):
    Hp, Wp = H + k - 1, W + k - 1

    def kernel(*refs):
        if has_expand:
            x_ref, w1_ref, b1_ref, dw_ref, b2_ref, y_ref, pool_ref, ep_ref = refs
        else:
            x_ref, dw_ref, b2_ref, y_ref, pool_ref, ep_ref = refs
        C = dw_ref.shape[-1]

        # Zero the halo'd scratch plane (replaces the old host-side jnp.pad
        # HBM round trip with a cheap VMEM store).
        ep_ref[...] = jnp.zeros((Hp, Wp, C), jnp.float32)

        if has_expand:
            cin = x_ref.shape[-1]
            xm = x_ref[0].reshape(H * W, cin)
            # bf16 MXU operands, f32 accumulation; BN1 scale pre-folded into w1.
            e = jnp.dot(xm.astype(cdt), w1_ref[...],
                        preferred_element_type=jnp.float32)
            e = _swish(e + b1_ref[...])
            e = e.reshape(H, W, C)
        else:
            e = x_ref[0].astype(jnp.float32)

        ep_ref[pt:pt + H, pt:pt + W, :] = e

        # Depthwise conv (BN2 scale folded into the taps on the host).
        # Only k misaligned width shifts (hoisted); kh shifts are cheap
        # outer-dim slices of the already-loaded view.
        dwall = dw_ref[...]
        acc = jnp.zeros((H, W, C), jnp.float32)
        for kw in range(k):
            xw = ep_ref[:, kw:kw + W, :]            # (Hp, W, C)
            for kh in range(k):
                acc = acc + xw[kh:kh + H] * dwall[kh * k + kw].reshape(1, 1, C)

        y = _swish(acc + b2_ref[...].reshape(1, 1, C))

        # SE pooled sum (f32, before the activation is rounded for storage).
        pool_ref[...] = jnp.sum(y, axis=(0, 1)).reshape(1, 1, C)
        y_ref[0] = y.astype(y_ref.dtype)

    return kernel


def _expand_dw_pool(x_nhwc, w1, b1, dw, b2, *, k, has_expand, cdt, cmid_p):
    N, H, W, Cx = x_nhwc.shape
    pt = (k - 1) // 2
    Hp, Wp = H + k - 1, W + k - 1

    in_specs = [pl.BlockSpec((1, H, W, Cx), lambda b: (b, 0, 0, 0))]
    args = [x_nhwc]
    if has_expand:
        in_specs += [pl.BlockSpec((Cx, cmid_p), lambda b: (0, 0)),
                     pl.BlockSpec((1, cmid_p), lambda b: (0, 0))]
        args += [w1, b1]
    in_specs += [pl.BlockSpec((k * k, cmid_p), lambda b: (0, 0)),
                 pl.BlockSpec((1, cmid_p), lambda b: (0, 0))]
    args += [dw, b2]

    y, pooled = pl.pallas_call(
        _make_expand_dw_kernel(has_expand, H, W, k, pt, cdt),
        out_shape=(jax.ShapeDtypeStruct((N, H, W, cmid_p), cdt),
                   jax.ShapeDtypeStruct((N, 1, cmid_p), jnp.float32)),
        grid_spec=pltpu.PrefetchScalarGridSpec(
            num_scalar_prefetch=0,
            grid=(N,),
            in_specs=in_specs,
            out_specs=[pl.BlockSpec((1, H, W, cmid_p), lambda b: (b, 0, 0, 0)),
                       pl.BlockSpec((1, 1, cmid_p), lambda b: (b, 0, 0))],
            scratch_shapes=[pltpu.VMEM((Hp, Wp, cmid_p), jnp.float32)],
        ),
        compiler_params=pltpu.CompilerParams(
            dimension_semantics=("parallel",),
            vmem_limit_bytes=_vmem_limit()),
    )(*args)
    return y, pooled


# ---------------------------------------------------------------------------
# Kernel B: tiny batched SE MLP (pooled -> fc1 -> Swish -> fc2 -> sigmoid)
# ---------------------------------------------------------------------------
def _make_se_kernel(inv_hw, cdt):
    def kernel(pool_ref, fc1_ref, fc2_ref, se_ref):
        pooled = pool_ref[...]
        p = pooled.reshape(pooled.shape[0], pooled.shape[-1]) * inv_hw
        h = jnp.dot(p.astype(cdt), fc1_ref[...],
                    preferred_element_type=jnp.float32)
        h = _swish(h)
        s = jnp.dot(h.astype(cdt), fc2_ref[...],
                    preferred_element_type=jnp.float32)
        s = _stable_sigmoid(s)
        se_ref[...] = s[:, None, :]
    return kernel


# ---------------------------------------------------------------------------
# Kernel C: fused [SE scale apply] + 1x1 projection conv + BN3 (+ residual)
# ---------------------------------------------------------------------------
def _make_proj_kernel(has_residual, cdt):
    def kernel(*refs):
        if has_residual:
            y_ref, se_ref, w_ref, b_ref, r_ref, o_ref = refs
        else:
            y_ref, se_ref, w_ref, b_ref, o_ref = refs
        ys = y_ref[0].astype(jnp.float32) * se_ref[0]       # (bm, C) * (1, C)
        acc = jnp.dot(ys.astype(cdt), w_ref[...],
                      preferred_element_type=jnp.float32)
        acc = acc + b_ref[...]                               # BN3 bias (scale folded)
        if has_residual:
            acc = acc + r_ref[0].astype(jnp.float32)
        o_ref[0] = acc.astype(o_ref.dtype)
    return kernel


def _proj_pointwise(y, se, w, b, residual, *, bm, cdt, out_dtype):
    N, HW, C = y.shape
    coutp = w.shape[1]
    in_specs = [
        pl.BlockSpec((1, bm, C), lambda b_, i: (b_, i, 0)),
        pl.BlockSpec((1, 1, C), lambda b_, i: (b_, 0, 0)),
        pl.BlockSpec((C, coutp), lambda b_, i: (0, 0)),
        pl.BlockSpec((1, coutp), lambda b_, i: (0, 0)),
    ]
    args = [y, se, w, b]
    if residual is not None:
        in_specs.append(pl.BlockSpec((1, bm, coutp), lambda b_, i: (b_, i, 0)))
        args.append(residual)

    return pl.pallas_call(
        _make_proj_kernel(residual is not None, cdt),
        out_shape=jax.ShapeDtypeStruct((N, HW, coutp), out_dtype),
        grid_spec=pltpu.PrefetchScalarGridSpec(
            num_scalar_prefetch=0,
            grid=(N, HW // bm),
            in_specs=in_specs,
            out_specs=pl.BlockSpec((1, bm, coutp), lambda b_, i: (b_, i, 0)),
        ),
        compiler_params=pltpu.CompilerParams(
            dimension_semantics=("parallel", "parallel"),
            vmem_limit_bytes=_vmem_limit()),
    )(*args)


# ---------------------------------------------------------------------------
# Full Bottleneck forward (eval mode)
# ---------------------------------------------------------------------------
def bottleneck_forward(x, params, *, kernel_size, stride, expand,
                       compute_dtype=jnp.bfloat16):
    """x: (N, Cin, H, W) -> (N, planes, H, W)."""
    eps = 1e-3  # matches nn.BatchNorm2d(..., eps=0.001) in the PyTorch module
    if stride != 1:
        # TODO(synk): stride > 1 with 'same' padding not supported.
        raise NotImplementedError("only stride == 1 is supported")

    N, Cin, H, W = x.shape
    planes = params["conv3_w"].shape[0]
    Cmid = Cin * expand
    Cmid_p = _lane_pad_dim(Cmid)
    Cout_p = _lane_pad_dim(planes)
    correct_dim = (stride == 1) and (Cin == planes)
    cdt = compute_dtype
    has_expand = (expand != 1)

    def fold_bn(p):
        s = p["gamma"] / jnp.sqrt(p["var"] + eps)
        b = p["beta"] - p["mean"] * s
        return s.astype(jnp.float32), b.astype(jnp.float32)

    # TODO(synk): in a stacked network keep NHWC end-to-end and drop these
    #             boundary transposes.
    x_nhwc = jnp.transpose(x, (0, 2, 3, 1))

    # Hoisted weight prep (BN scales folded into weights / taps).
    s2, b2 = fold_bn(params["bn2"])
    dw = jnp.transpose(params["conv2_w"][:, 0, :, :], (1, 2, 0))
    dw = dw.reshape(kernel_size * kernel_size, Cmid)
    dw = _pad_last(dw * s2[None, :], Cmid_p).astype(jnp.float32)  # VPU path: f32
    b2p = _pad_last(b2.reshape(1, Cmid), Cmid_p)

    if has_expand:
        s1, b1 = fold_bn(params["bn1"])
        w1 = jnp.transpose(params["conv1_w"][:, :, 0, 0], (1, 0)) * s1[None, :]
        w1 = _pad_last(w1, Cmid_p).astype(cdt)
        b1p = _pad_last(b1.reshape(1, Cmid), Cmid_p)
        x_in = x_nhwc
    else:
        w1, b1p = None, None
        x_in = _pad_last(x_nhwc, Cmid_p)

    # Stage 1: fused expand + depthwise + BN + Swish, plus SE pooled sums.
    y, pooled = _expand_dw_pool(x_in, w1, b1p, dw, b2p, k=kernel_size,
                                has_expand=has_expand, cdt=cdt, cmid_p=Cmid_p)

    # Stage 2: tiny batched SE MLP.
    hidden = params["fc1_w"].shape[0]
    fc1 = jnp.transpose(params["fc1_w"], (1, 0))                 # (Cmid, hidden)
    fc1 = jnp.pad(fc1, ((0, Cmid_p - Cmid), (0, 0))).astype(cdt)
    fc2 = jnp.transpose(params["fc2_w"], (1, 0))                 # (hidden, Cmid)
    fc2 = _pad_last(fc2, Cmid_p).astype(cdt)
    se = pl.pallas_call(
        _make_se_kernel(1.0 / float(H * W), cdt),
        out_shape=jax.ShapeDtypeStruct((N, 1, Cmid_p), jnp.float32),
    )(pooled, fc1, fc2)

    # Stage 3: SE-apply + projection 1x1 conv + BN3 (+ residual), lane-dense out.
    s3, b3 = fold_bn(params["bn3"])
    w3 = jnp.transpose(params["conv3_w"][:, :, 0, 0], (1, 0)) * s3[None, :]
    w3 = jnp.pad(w3, ((0, Cmid_p - Cmid), (0, Cout_p - planes))).astype(cdt)
    b3p = _pad_last(b3.reshape(1, planes), Cout_p)

    HW = H * W
    bm = _pick_row_block(HW)
    y2 = y.reshape(N, HW, Cmid_p)
    res = None
    if correct_dim:
        res = _pad_last(x_nhwc.reshape(N, HW, Cin), Cout_p)      # small tensor

    out = _proj_pointwise(y2, se, w3, b3p, res, bm=bm, cdt=cdt,
                          out_dtype=x.dtype)
    out = out[..., :planes].reshape(N, H, W, planes)
    return jnp.transpose(out, (0, 3, 1, 2))


# ---------------------------------------------------------------------------
# Pure-JAX reference (independent of the Pallas path)
# ---------------------------------------------------------------------------
def bottleneck_ref(x, params, *, kernel_size, stride, expand):
    eps = 1e-3
    hp = jax.lax.Precision.HIGHEST

    def bn(y, p):
        s = p["gamma"] / jnp.sqrt(p["var"] + eps)
        b = p["beta"] - p["mean"] * s
        return y * s[None, :, None, None] + b[None, :, None, None]

    def swish(y):
        return y * jax.nn.sigmoid(y)

    out = x
    if expand != 1:
        out = jnp.einsum("nchw,oc->nohw", out, params["conv1_w"][:, :, 0, 0],
                         precision=hp)
        out = swish(bn(out, params["bn1"]))
    out = jax.lax.conv_general_dilated(
        out, params["conv2_w"], window_strides=(stride, stride), padding="SAME",
        dimension_numbers=("NCHW", "OIHW", "NCHW"),
        feature_group_count=out.shape[1], precision=hp)
    out = swish(bn(out, params["bn2"]))
    pooled = jnp.mean(out, axis=(2, 3))
    h = swish(jnp.dot(pooled, params["fc1_w"].T, precision=hp))
    s = jax.nn.sigmoid(jnp.dot(h, params["fc2_w"].T, precision=hp))
    out = out * s[:, :, None, None]
    out = jnp.einsum("nchw,oc->nohw", out, params["conv3_w"][:, :, 0, 0],
                     precision=hp)
    out = bn(out, params["bn3"])
    planes = params["conv3_w"].shape[0]
    if stride == 1 and x.shape[1] == planes:
        out = out + x
    return out


if __name__ == "__main__":
    key = jax.random.PRNGKey(0)

    def bn_params(keys, c):
        return dict(
            gamma=1.0 + 0.1 * jax.random.normal(keys[0], (c,), jnp.float32),
            beta=0.1 * jax.random.normal(keys[1], (c,), jnp.float32),
            mean=0.1 * jax.random.normal(keys[2], (c,), jnp.float32),
            var=jax.random.uniform(keys[3], (c,), jnp.float32,
                                   minval=0.5, maxval=1.5),
        )

    def make_params(pkey, cin, planes, k, expand, se_ratio):
        cmid = cin * expand
        hidden = max(1, int(cmid * se_ratio))
        ks = jax.random.split(pkey, 18)
        p = dict(
            conv2_w=0.3 * jax.random.normal(ks[0], (cmid, 1, k, k), jnp.float32),
            conv3_w=0.3 * jax.random.normal(ks[1], (planes, cmid, 1, 1), jnp.float32),
            fc1_w=0.3 * jax.random.normal(ks[2], (hidden, cmid), jnp.float32),
            fc2_w=0.3 * jax.random.normal(ks[3], (cmid, hidden), jnp.float32),
            bn2=bn_params(ks[4:8], cmid),
            bn3=bn_params(ks[8:12], planes),
        )
        if expand != 1:
            p["conv1_w"] = 0.3 * jax.random.normal(ks[12], (cmid, cin, 1, 1),
                                                   jnp.float32)
            p["bn1"] = bn_params(ks[13:17], cmid)
        return p

    k1, k2, k3, k4 = jax.random.split(key, 4)

    # Config 1: expansion block (expand=6), residual active, 2x4x16x16 input.
    N, Cin, H, W = 2, 4, 16, 16
    kk, expand = 3, 6
    x = jax.random.normal(k1, (N, Cin, H, W), jnp.float32)
    params = make_params(k2, Cin, Cin, kk, expand, 0.25)
    ref = bottleneck_ref(x, params, kernel_size=kk, stride=1, expand=expand)

    # f32 compute path: tight numerical check of the kernel logic.
    out_f32 = jax.block_until_ready(
        bottleneck_forward(x, params, kernel_size=kk, stride=1, expand=expand,
                           compute_dtype=jnp.float32))
    assert out_f32.shape == (N, Cin, H, W), out_f32.shape
    err = float(jnp.max(jnp.abs(out_f32 - ref)))
    assert err < 1e-3, f"f32 path error {err}"

    # Default bf16-MXU path: looser tolerance for bf16 operand rounding.
    out_bf16 = jax.block_until_ready(
        bottleneck_forward(x, params, kernel_size=kk, stride=1, expand=expand))
    err_bf = float(jnp.max(jnp.abs(out_bf16 - ref)))
    ref_scale = 1.0 + float(jnp.max(jnp.abs(ref)))
    assert err_bf < 5e-2 * ref_scale, f"bf16 path error {err_bf}"

    # Config 2: expand == 1 block (no expansion conv), residual active.
    N2, Cin2 = 2, 8
    x2 = jax.random.normal(k3, (N2, Cin2, H, W), jnp.float32)
    params2 = make_params(k4, Cin2, Cin2, kk, 1, 0.25)
    ref2 = bottleneck_ref(x2, params2, kernel_size=kk, stride=1, expand=1)
    out2 = jax.block_until_ready(
        bottleneck_forward(x2, params2, kernel_size=kk, stride=1, expand=1,
                           compute_dtype=jnp.float32))
    err2 = float(jnp.max(jnp.abs(out2 - ref2)))
    assert err2 < 1e-3, f"expand=1 path error {err2}"

    print("KERNEL_OK")
</pallas_src>

<mosaic_0001>
module attributes {stable_mosaic.version = 11 : i64} {
  func.func @kernel(%arg0: i32, %arg1: memref<1x16x16x4xf32, #tpu.memory_space<vmem>>, %arg2: memref<4x128xf32, #tpu.memory_space<vmem>>, %arg3: memref<1x128xf32, #tpu.memory_space<vmem>>, %arg4: memref<9x128xf32, #tpu.memory_space<vmem>>, %arg5: memref<1x128xf32, #tpu.memory_space<vmem>>, %arg6: memref<1x16x16x128xf32, #tpu.memory_space<vmem>>, %arg7: memref<1x1x128xf32, #tpu.memory_space<vmem>>, %arg8: memref<18x18x128xf32, #tpu.memory_space<vmem>>) attributes {dimension_semantics = [#tpu.dimension_semantics<parallel>], iteration_bounds = array<i64: 2>, scalar_prefetch = 0 : i64, scratch_operands = 1 : i64, tpu.core_type = #tpu.core_type<tc>, window_params = [{transform_indices = @transform_0, window_bounds = array<i64: 1, 16, 16, 4>}, {pipeline_mode = #tpu.pipeline_mode<synchronous>, transform_indices = @transform_1, window_bounds = array<i64: 4, 128>}, {pipeline_mode = #tpu.pipeline_mode<synchronous>, transform_indices = @transform_2, window_bounds = array<i64: 1, 128>}, {pipeline_mode = #tpu.pipeline_mode<synchronous>, transform_indices = @transform_3, window_bounds = array<i64: 9, 128>}, {pipeline_mode = #tpu.pipeline_mode<synchronous>, transform_indices = @transform_4, window_bounds = array<i64: 1, 128>}, {transform_indices = @transform_5, window_bounds = array<i64: 1, 16, 16, 128>}, {transform_indices = @transform_6, window_bounds = array<i64: 1, 1, 128>}]} {
    %cst = arith.constant 0.000000e+00 : f32
    %0 = vector.broadcast %cst : f32 to vector<18x18x128xf32>
    %c0 = arith.constant 0 : index
    %c0_0 = arith.constant 0 : index
    %c0_1 = arith.constant 0 : index
    %1 = vector.load %arg8[%c0, %c0_0, %c0_1] : memref<18x18x128xf32, #tpu.memory_space<vmem>>, vector<18x18x128xf32>
    tpu.vector_store %arg8[%c0, %c0_0, %c0_1], %0 {strides = array<i32>} : memref<18x18x128xf32, #tpu.memory_space<vmem>>, vector<18x18x128xf32>,
    %c0_2 = arith.constant 0 : index
    %c0_3 = arith.constant 0 : index
    %c0_4 = arith.constant 0 : index
    %c0_5 = arith.constant 0 : index
    %2 = vector.load %arg1[%c0_2, %c0_3, %c0_4, %c0_5] : memref<1x16x16x4xf32, #tpu.memory_space<vmem>>, vector<1x16x16x4xf32>
    %3 = vector.shape_cast %2 : vector<1x16x16x4xf32> to vector<16x16x4xf32>
    %4 = vector.shape_cast %3 : vector<16x16x4xf32> to vector<256x4xf32>
    %c0_6 = arith.constant 0 : index
    %c0_7 = arith.constant 0 : index
    %5 = vector.load %arg2[%c0_6, %c0_7] : memref<4x128xf32, #tpu.memory_space<vmem>>, vector<4x128xf32>
    %cst_8 = arith.constant dense<0.000000e+00> : vector<256x128xf32>
    %6 = tpu.matmul %4, %5, %cst_8 {dimension_numbers = #tpu.dot_dimension_numbers<[1], [0], [0], [1], [0, 0, 1, 1], [], []>} : vector<256x4xf32>, vector<4x128xf32>, vector<256x128xf32> -> vector<256x128xf32>
    %c0_9 = arith.constant 0 : index
    %c0_10 = arith.constant 0 : index
    %7 = vector.load %arg3[%c0_9, %c0_10] : memref<1x128xf32, #tpu.memory_space<vmem>>, vector<1x128xf32>
    %8 = vector.broadcast %7 : vector<1x128xf32> to vector<256x128xf32>
    %9 = arith.addf %6, %8 : vector<256x128xf32>
    %10 = math.absf %9 : vector<256x128xf32>
    %cst_11 = arith.constant 0.000000e+00 : f32
    %11 = vector.broadcast %cst_11 : f32 to vector<256x128xf32>
    %12 = arith.subf %11, %10 : vector<256x128xf32>
    %13 = math.exp %12 : vector<256x128xf32>
    %cst_12 = arith.constant 0.000000e+00 : f32
    %14 = vector.broadcast %cst_12 : f32 to vector<256x128xf32>
    %15 = arith.cmpf oge, %9, %14 : vector<256x128xf32>
    %cst_13 = arith.constant 1.000000e+00 : f32
    %16 = vector.broadcast %cst_13 : f32 to vector<256x128xf32>
    %17 = arith.addf %16, %13 : vector<256x128xf32>
    %cst_14 = arith.constant 1.000000e+00 : f32
    %18 = vector.broadcast %cst_14 : f32 to vector<256x128xf32>
    %19 = arith.divf %18, %17 : vector<256x128xf32>
    %cst_15 = arith.constant 1.000000e+00 : f32
    %20 = vector.broadcast %cst_15 : f32 to vector<256x128xf32>
    %21 = arith.addf %20, %13 : vector<256x128xf32>
    %22 = arith.divf %13, %21 : vector<256x128xf32>
    %23 = arith.select %15, %19, %22 : vector<256x128xi1>, vector<256x128xf32>
    %24 = arith.mulf %9, %23 : vector<256x128xf32>
    %25 = vector.shape_cast %24 : vector<256x128xf32> to vector<16x16x128xf32>
    %c1 = arith.constant 1 : index
    %c1_16 = arith.constant 1 : index
    %c0_17 = arith.constant 0 : index
    %26 = vector.load %arg8[%c1, %c1_16, %c0_17] : memref<18x18x128xf32, #tpu.memory_space<vmem>>, vector<16x16x128xf32>
    tpu.vector_store %arg8[%c1, %c1_16, %c0_17], %25 {strides = array<i32>} : memref<18x18x128xf32, #tpu.memory_space<vmem>>, vector<16x16x128xf32>,
    %c0_18 = arith.constant 0 : index
    %c0_19 = arith.constant 0 : index
    %27 = vector.load %arg4[%c0_18, %c0_19] : memref<9x128xf32, #tpu.memory_space<vmem>>, vector<9x128xf32>
    %cst_20 = arith.constant 0.000000e+00 : f32
    %28 = vector.broadcast %cst_20 : f32 to vector<16x16x128xf32>
    %c0_21 = arith.constant 0 : index
    %c0_22 = arith.constant 0 : index
    %c0_23 = arith.constant 0 : index
    %29 = vector.load %arg8[%c0_21, %c0_22, %c0_23] : memref<18x18x128xf32, #tpu.memory_space<vmem>>, vector<18x16x128xf32>
    %30 = vector.extract_strided_slice %29 {offsets = [0, 0, 0], sizes = [16, 16, 128], strides = [1, 1, 1]} : vector<18x16x128xf32> to vector<16x16x128xf32>
    %31 = vector.extract_strided_slice %27 {offsets = [0, 0], sizes = [1, 128], strides = [1, 1]} : vector<9x128xf32> to vector<1x128xf32>
    %32 = vector.shape_cast %31 : vector<1x128xf32> to vector<128xf32>
    %33 = vector.shape_cast %32 : vector<128xf32> to vector<1x1x128xf32>
    %34 = vector.broadcast %33 : vector<1x1x128xf32> to vector<16x16x128xf32>
    %35 = arith.mulf %30, %34 : vector<16x16x128xf32>
    %36 = arith.addf %28, %35 : vector<16x16x128xf32>
    %37 = vector.extract_strided_slice %29 {offsets = [1, 0, 0], sizes = [16, 16, 128], strides = [1, 1, 1]} : vector<18x16x128xf32> to vector<16x16x128xf32>
    %38 = vector.extract_strided_slice %27 {offsets = [3, 0], sizes = [1, 128], strides = [1, 1]} : vector<9x128xf32> to vector<1x128xf32>
    %39 = vector.shape_cast %38 : vector<1x128xf32> to vector<128xf32>
    %40 = vector.shape_cast %39 : vector<128xf32> to vector<1x1x128xf32>
    %41 = vector.broadcast %40 : vector<1x1x128xf32> to vector<16x16x128xf32>
    %42 = arith.mulf %37, %41 : vector<16x16x128xf32>
    %43 = arith.addf %36, %42 : vector<16x16x128xf32>
    %44 = vector.extract_strided_slice %29 {offsets = [2, 0, 0], sizes = [16, 16, 128], strides = [1, 1, 1]} : vector<18x16x128xf32> to vector<16x16x128xf32>
    %45 = vector.extract_strided_slice %27 {offsets = [6, 0], sizes = [1, 128], strides = [1, 1]} : vector<9x128xf32> to vector<1x128xf32>
    %46 = vector.shape_cast %45 : vector<1x128xf32> to vector<128xf32>
    %47 = vector.shape_cast %46 : vector<128xf32> to vector<1x1x128xf32>
    %48 = vector.broadcast %47 : vector<1x1x128xf32> to vector<16x16x128xf32>
    %49 = arith.mulf %44, %48 : vector<16x16x128xf32>
    %50 = arith.addf %43, %49 : vector<16x16x128xf32>
    %c0_24 = arith.constant 0 : index
    %c1_25 = arith.constant 1 : index
    %c0_26 = arith.constant 0 : index
    %51 = vector.load %arg8[%c0_24, %c1_25, %c0_26] : memref<18x18x128xf32, #tpu.memory_space<vmem>>, vector<18x16x128xf32>
    %52 = vector.extract_strided_slice %51 {offsets = [0, 0, 0], sizes = [16, 16, 128], strides = [1, 1, 1]} : vector<18x16x128xf32> to vector<16x16x128xf32>
    %53 = vector.extract_strided_slice %27 {offsets = [1, 0], sizes = [1, 128], strides = [1, 1]} : vector<9x128xf32> to vector<1x128xf32>
    %54 = vector.shape_cast %53 : vector<1x128xf32> to vector<128xf32>
    %55 = vector.shape_cast %54 : vector<128xf32> to vector<1x1x128xf32>
    %56 = vector.broadcast %55 : vector<1x1x128xf32> to vector<16x16x128xf32>
    %57 = arith.mulf %52, %56 : vector<16x16x128xf32>
    %58 = arith.addf %50, %57 : vector<16x16x128xf32>
    %59 = vector.extract_strided_slice %51 {offsets = [1, 0, 0], sizes = [16, 16, 128], strides = [1, 1, 1]} : vector<18x16x128xf32> to vector<16x16x128xf32>
    %60 = vector.extract_strided_slice %27 {offsets = [4, 0], sizes = [1, 128], strides = [1, 1]} : vector<9x128xf32> to vector<1x128xf32>
    %61 = vector.shape_cast %60 : vector<1x128xf32> to vector<128xf32>
    %62 = vector.shape_cast %61 : vector<128xf32> to vector<1x1x128xf32>
    %63 = vector.broadcast %62 : vector<1x1x128xf32> to vector<16x16x128xf32>
    %64 = arith.mulf %59, %63 : vector<16x16x128xf32>
    %65 = arith.addf %58, %64 : vector<16x16x128xf32>
    %66 = vector.extract_strided_slice %51 {offsets = [2, 0, 0], sizes = [16, 16, 128], strides = [1, 1, 1]} : vector<18x16x128xf32> to vector<16x16x128xf32>
    %67 = vector.extract_strided_slice %27 {offsets = [7, 0], sizes = [1, 128], strides = [1, 1]} : vector<9x128xf32> to vector<1x128xf32>
    %68 = vector.shape_cast %67 : vector<1x128xf32> to vector<128xf32>
    %69 = vector.shape_cast %68 : vector<128xf32> to vector<1x1x128xf32>
    %70 = vector.broadcast %69 : vector<1x1x128xf32> to vector<16x16x128xf32>
    %71 = arith.mulf %66, %70 : vector<16x16x128xf32>
    %72 = arith.addf %65, %71 : vector<16x16x128xf32>
    %c0_27 = arith.constant 0 : index
    %c2 = arith.constant 2 : index
    %c0_28 = arith.constant 0 : index
    %73 = vector.load %arg8[%c0_27, %c2, %c0_28] : memref<18x18x128xf32, #tpu.memory_space<vmem>>, vector<18x16x128xf32>
    %74 = vector.extract_strided_slice %73 {offsets = [0, 0, 0], sizes = [16, 16, 128], strides = [1, 1, 1]} : vector<18x16x128xf32> to vector<16x16x128xf32>
    %75 = vector.extract_strided_slice %27 {offsets = [2, 0], sizes = [1, 128], strides = [1, 1]} : vector<9x128xf32> to vector<1x128xf32>
    %76 = vector.shape_cast %75 : vector<1x128xf32> to vector<128xf32>
    %77 = vector.shape_cast %76 : vector<128xf32> to vector<1x1x128xf32>
    %78 = vector.broadcast %77 : vector<1x1x128xf32> to vector<16x16x128xf32>
    %79 = arith.mulf %74, %78 : vector<16x16x128xf32>
    %80 = arith.addf %72, %79 : vector<16x16x128xf32>
    %81 = vector.extract_strided_slice %73 {offsets = [1, 0, 0], sizes = [16, 16, 128], strides = [1, 1, 1]} : vector<18x16x128xf32> to vector<16x16x128xf32>
    %82 = vector.extract_strided_slice %27 {offsets = [5, 0], sizes = [1, 128], strides = [1, 1]} : vector<9x128xf32> to vector<1x128xf32>
    %83 = vector.shape_cast %82 : vector<1x128xf32> to vector<128xf32>
    %84 = vector.shape_cast %83 : vector<128xf32> to vector<1x1x128xf32>
    %85 = vector.broadcast %84 : vector<1x1x128xf32> to vector<16x16x128xf32>
    %86 = arith.mulf %81, %85 : vector<16x16x128xf32>
    %87 = arith.addf %80, %86 : vector<16x16x128xf32>
    %88 = vector.extract_strided_slice %73 {offsets = [2, 0, 0], sizes = [16, 16, 128], strides = [1, 1, 1]} : vector<18x16x128xf32> to vector<16x16x128xf32>
    %89 = vector.extract_strided_slice %27 {offsets = [8, 0], sizes = [1, 128], strides = [1, 1]} : vector<9x128xf32> to vector<1x128xf32>
    %90 = vector.shape_cast %89 : vector<1x128xf32> to vector<128xf32>
    %91 = vector.shape_cast %90 : vector<128xf32> to vector<1x1x128xf32>
    %92 = vector.broadcast %91 : vector<1x1x128xf32> to vector<16x16x128xf32>
    %93 = arith.mulf %88, %92 : vector<16x16x128xf32>
    %94 = arith.addf %87, %93 : vector<16x16x128xf32>
    %c0_29 = arith.constant 0 : index
    %c0_30 = arith.constant 0 : index
    %95 = vector.load %arg5[%c0_29, %c0_30] : memref<1x128xf32, #tpu.memory_space<vmem>>, vector<1x128xf32>
    %96 = vector.shape_cast %95 : vector<1x128xf32> to vector<1x1x128xf32>
    %97 = vector.broadcast %96 : vector<1x1x128xf32> to vector<16x16x128xf32>
    %98 = arith.addf %94, %97 : vector<16x16x128xf32>
    %99 = math.absf %98 : vector<16x16x128xf32>
    %cst_31 = arith.constant 0.000000e+00 : f32
    %100 = vector.broadcast %cst_31 : f32 to vector<16x16x128xf32>
    %101 = arith.subf %100, %99 : vector<16x16x128xf32>
    %102 = math.exp %101 : vector<16x16x128xf32>
    %cst_32 = arith.constant 0.000000e+00 : f32
    %103 = vector.broadcast %cst_32 : f32 to vector<16x16x128xf32>
    %104 = arith.cmpf oge, %98, %103 : vector<16x16x128xf32>
    %cst_33 = arith.constant 1.000000e+00 : f32
    %105 = vector.broadcast %cst_33 : f32 to vector<16x16x128xf32>
    %106 = arith.addf %105, %102 : vector<16x16x128xf32>
    %cst_34 = arith.constant 1.000000e+00 : f32
    %107 = vector.broadcast %cst_34 : f32 to vector<16x16x128xf32>
    %108 = arith.divf %107, %106 : vector<16x16x128xf32>
    %cst_35 = arith.constant 1.000000e+00 : f32
    %109 = vector.broadcast %cst_35 : f32 to vector<16x16x128xf32>
    %110 = arith.addf %109, %102 : vector<16x16x128xf32>
    %111 = arith.divf %102, %110 : vector<16x16x128xf32>
    %112 = arith.select %104, %108, %111 : vector<16x16x128xi1>, vector<16x16x128xf32>
    %113 = arith.mulf %98, %112 : vector<16x16x128xf32>
    %cst_36 = arith.constant dense<0.000000e+00> : vector<128xf32>
    %114 = vector.multi_reduction <add>, %113, %cst_36 [0, 1] : vector<16x16x128xf32> to vector<128xf32>
    %115 = vector.shape_cast %114 : vector<128xf32> to vector<1x1x128xf32>
    %c0_37 = arith.constant 0 : index
    %c0_38 = arith.constant 0 : index
    %c0_39 = arith.constant 0 : index
    %116 = vector.load %arg7[%c0_37, %c0_38, %c0_39] : memref<1x1x128xf32, #tpu.memory_space<vmem>>, vector<1x1x128xf32>
    tpu.vector_store %arg7[%c0_37, %c0_38, %c0_39], %115 {strides = array<i32>} : memref<1x1x128xf32, #tpu.memory_space<vmem>>, vector<1x1x128xf32>,
    %c0_40 = arith.constant 0 : index
    %c0_41 = arith.constant 0 : index
    %c0_42 = arith.constant 0 : index
    %c0_43 = arith.constant 0 : index
    %117 = vector.load %arg6[%c0_40, %c0_41, %c0_42, %c0_43] : memref<1x16x16x128xf32, #tpu.memory_space<vmem>>, vector<1x16x16x128xf32>
    %118 = vector.shape_cast %117 : vector<1x16x16x128xf32> to vector<16x16x128xf32>
    %119 = vector.shape_cast %113 : vector<16x16x128xf32> to vector<1x16x16x128xf32>
    tpu.vector_store %arg6[%c0_40, %c0_41, %c0_42, %c0_43], %119 {strides = array<i32>} : memref<1x16x16x128xf32, #tpu.memory_space<vmem>>, vector<1x16x16x128xf32>,
    return
  }
  func.func @transform_0(%arg0: i32) -> (i32, i32, i32, i32) {
    %c0_i32 = arith.constant 0 : i32
    %c0_i32_0 = arith.constant 0 : i32
    %c0_i32_1 = arith.constant 0 : i32
    %c0_i32_2 = arith.constant 0 : i32
    return %arg0, %c0_i32, %c0_i32_0, %c0_i32_1 : i32, i32, i32, i32
  }
  func.func @transform_1(%arg0: i32) -> (i32, i32) {
    %c0_i32 = arith.constant 0 : i32
    %c0_i32_0 = arith.constant 0 : i32
    %c0_i32_1 = arith.constant 0 : i32
    return %c0_i32, %c0_i32_0 : i32, i32
  }
  func.func @transform_2(%arg0: i32) -> (i32, i32) {
    %c0_i32 = arith.constant 0 : i32
    %c0_i32_0 = arith.constant 0 : i32
    %c0_i32_1 = arith.constant 0 : i32
    return %c0_i32, %c0_i32_0 : i32, i32
  }
  func.func @transform_3(%arg0: i32) -> (i32, i32) {
    %c0_i32 = arith.constant 0 : i32
    %c0_i32_0 = arith.constant 0 : i32
    %c0_i32_1 = arith.constant 0 : i32
    return %c0_i32, %c0_i32_0 : i32, i32
  }
  func.func @transform_4(%arg0: i32) -> (i32, i32) {
    %c0_i32 = arith.constant 0 : i32
    %c0_i32_0 = arith.constant 0 : i32
    %c0_i32_1 = arith.constant 0 : i32
    return %c0_i32, %c0_i32_0 : i32, i32
  }
  func.func @transform_5(%arg0: i32) -> (i32, i32, i32, i32) {
    %c0_i32 = arith.constant 0 : i32
    %c0_i32_0 = arith.constant 0 : i32
    %c0_i32_1 = arith.constant 0 : i32
    %c0_i32_2 = arith.constant 0 : i32
    return %arg0, %c0_i32, %c0_i32_0, %c0_i32_1 : i32, i32, i32, i32
  }
  func.func @transform_6(%arg0: i32) -> (i32, i32, i32) {
    %c0_i32 = arith.constant 0 : i32
    %c0_i32_0 = arith.constant 0 : i32
    %c0_i32_1 = arith.constant 0 : i32
    return %arg0, %c0_i32, %c0_i32_0 : i32, i32, i32
  }
}

</mosaic_0001>

<llo_original>
// kernel: tpu_custom_call.1
$region0: #{tpu_custom_call.1}
  #allocation0 [shape = 'u32[]', space=smem, size = 0x4, offset = 0x4, fixed_abs, tag = 'smem constant byte address 0x4 - core index']
  #allocation1 [shape = 'u32[144,128]{1,0:T(1,128)}', space=vmem, size = 0x12000, scoped, tag = 'internal scratch']
  #allocation2 [shape = 'f32[18,18,128]{2,1,0:T(8,128)}', space=vmem, size = 0x36000, scoped, tag = 'scratch operand']
  %s0 = inlined_call_operand.vmem [shape: f32[2,16,16,4], index: 0, kind: input, shape index: {}]
  %s1 = inlined_call_operand.vmem [shape: f32[4,128], index: 1, kind: input, shape index: {}]
  %s2 = inlined_call_operand.vmem [shape: f32[1,128], index: 2, kind: input, shape index: {}]
  %s3 = inlined_call_operand.vmem [shape: f32[9,128], index: 3, kind: input, shape index: {}]
  %s4 = inlined_call_operand.vmem [shape: f32[1,128], index: 4, kind: input, shape index: {}]
  %s5 = inlined_call_operand.hbm [shape: f32[2,16,16,128], index: 5, kind: output, shape index: {0}]
  %s6 = inlined_call_operand.hbm [shape: f32[2,1,128], index: 6, kind: output, shape index: {1}]
  %7 = xla_tuple %s5, %s6
  %s8 = sld [smem:[#allocation0]]
  $region61: #{tpu_custom_call.1} parent=0
    _
  %s10 = ssub.s32 1, %s8
  %s11 = scalar_select 0, %s10, %s8
  $region1: #{tpu_custom_call.1} parent=0
    #allocation3 [shape = 'u8[262144]{0}', space=vmem, size = 0x40000, scoped, tag = 'output window, operand 0']
    #allocation4 [shape = 's32[2]{0}', space=sflag, size = 0x8, scoped, tag = 'scoped memory for tpu_custom_call.1']
    #allocation5 [shape = 'u8[1024]{0}', space=vmem, size = 0x400, scoped, tag = 'output window, operand 1']
    #allocation6 [shape = 's32[2]{0}', space=sflag, size = 0x8, scoped, tag = 'scoped memory for tpu_custom_call.1']
    %12 = vsyncpa [#allocation4], 0
    %s13 = scalar_lea.sflag [#allocation4], 1
    %14 = vsyncpa %s13, 0
    %15 = vsyncpa [#allocation6], 0
    %s16 = scalar_lea.sflag [#allocation6], 1
    %17 = vsyncpa %s16, 0
    loop: start=0, step=1, limit=4
    $region2: #{tpu_custom_call.1} parent=1 // loop_pre_header
      _
    $region3: #{tpu_custom_call.1} parent=1 // loop_header
      %s19 = sphi 0, %s23
      %p20 = scmp.ge.s32.totalorder %s19, 4
      %s29 = sphi 0, %s31
      %s32 = sphi 0, %s29
      %s33 = sphi 0, %s32
      %s49 = sphi 0, %s33
      %s53 = sphi 0, %s53
      %s55 = sphi 0, %s53
      %s56 = sphi 0, %s55
      %s70 = sphi 0, %s56
      %s74 = sphi 0, %s74
      %s76 = sphi 0, %s74
      %s77 = sphi 0, %s76
      %s91 = sphi 0, %s77
      %s95 = sphi 0, %s95
      %s97 = sphi 0, %s95
      %s98 = sphi 0, %s97
      %s112 = sphi 0, %s98
      %s116 = sphi 0, %s116
      %s118 = sphi 0, %s116
      %s119 = sphi 0, %s118
      %s133 = sphi 0, %s119
      %s139 = sphi 0, %s141
      %s142 = sphi 0, %s139
      %s143 = sphi 0, %s142
      %s159 = sphi 0, %s143
      %s165 = sphi 0, %s167
      %s168 = sphi 0, %s165
      %s169 = sphi 0, %s168
      %s185 = sphi 0, %s169
    $region4: #{tpu_custom_call.1} parent=1 // loop_header_branch
      %22 = sbr.rel (%p20) target = $region8
    $region5: #{tpu_custom_call.1} parent=1 // loop_body
      %s24 = ssub.s32 %s19, 1
      %s25 = ssub.s32 %s19, 2
      %s26 = sadd.s32 %s19, 1
      %s27 = ssub.s32 %s19, %s26
      %p28 = scmp.eq.s32.totalorder %s27, 0
      %s30 = sadd.s32 %s29, 1
      %s31 = scalar_select %p28, %s29, %s30
      %p34 = pneg %p28
      %p35 = scmp.eq.s32.totalorder %s19, 1
      %p36 = por %p34, %p35
      %p37 = scmp.ne.s32.totalorder %s29, %s32
      %p38 = scmp.eq.s32.totalorder %s19, 0
      %p39 = por %p37, %p38
      %p40 = scmp.ne.s32.totalorder %s29, %s32
      %p41 = scmp.eq.s32.totalorder %s24, 1
      %p42 = por %p40, %p41
      %p43 = scmp.ne.s32.totalorder %s32, %s33
      %p44 = scmp.eq.s32.totalorder %s24, 0
      %p45 = por %p43, %p44
      %p46 = scmp.ne.s32.totalorder %s32, %s33
      %p47 = scmp.eq.s32.totalorder %s25, 1
      %p48 = por %p46, %p47
      %p50 = scmp.ne.s32.totalorder %s33, %s49
      %p51 = scmp.eq.s32.totalorder %s25, 0
      %p52 = por %p50, %p51
      %s54 = sadd.s32 %s53, 1
      %p57 = scmp.eq.s32.totalorder %s19, 1
      %p58 = scmp.ne.s32.totalorder %s53, %s55
      %p59 = scmp.eq.s32.totalorder %s19, 0
      %p60 = por %p58, %p59
      %p61 = scmp.ne.s32.totalorder %s53, %s55
      %p62 = scmp.eq.s32.totalorder %s24, 1
      %p63 = por %p61, %p62
      %p64 = scmp.ne.s32.totalorder %s55, %s56
      %p65 = scmp.eq.s32.totalorder %s24, 0
      %p66 = por %p64, %p65
      %p67 = scmp.ne.s32.totalorder %s55, %s56
      %p68 = scmp.eq.s32.totalorder %s25, 1
      %p69 = por %p67, %p68
      %p71 = scmp.ne.s32.totalorder %s56, %s70
      %p72 = scmp.eq.s32.totalorder %s25, 0
      %p73 = por %p71, %p72
      %s75 = sadd.s32 %s74, 1
      %p78 = scmp.eq.s32.totalorder %s19, 1
      %p79 = scmp.ne.s32.totalorder %s74, %s76
      %p80 = scmp.eq.s32.totalorder %s19, 0
      %p81 = por %p79, %p80
      %p82 = scmp.ne.s32.totalorder %s74, %s76
      %p83 = scmp.eq.s32.totalorder %s24, 1
      %p84 = por %p82, %p83
      %p85 = scmp.ne.s32.totalorder %s76, %s77
      %p86 = scmp.eq.s32.totalorder %s24, 0
      %p87 = por %p85, %p86
      %p88 = scmp.ne.s32.totalorder %s76, %s77
      %p89 = scmp.eq.s32.totalorder %s25, 1
      %p90 = por %p88, %p89
      %p92 = scmp.ne.s32.totalorder %s77, %s91
      %p93 = scmp.eq.s32.totalorder %s25, 0
      %p94 = por %p92, %p93
      %s96 = sadd.s32 %s95, 1
      %p99 = scmp.eq.s32.totalorder %s19, 1
      %p100 = scmp.ne.s32.totalorder %s95, %s97
      %p101 = scmp.eq.s32.totalorder %s19, 0
      %p102 = por %p100, %p101
      %p103 = scmp.ne.s32.totalorder %s95, %s97
      %p104 = scmp.eq.s32.totalorder %s24, 1
      %p105 = por %p103, %p104
      %p106 = scmp.ne.s32.totalorder %s97, %s98
      %p107 = scmp.eq.s32.totalorder %s24, 0
      %p108 = por %p106, %p107
      %p109 = scmp.ne.s32.totalorder %s97, %s98
      %p110 = scmp.eq.s32.totalorder %s25, 1
      %p111 = por %p109, %p110
      %p113 = scmp.ne.s32.totalorder %s98, %s112
      %p114 = scmp.eq.s32.totalorder %s25, 0
      %p115 = por %p113, %p114
      %s117 = sadd.s32 %s116, 1
      %p120 = scmp.eq.s32.totalorder %s19, 1
      %p121 = scmp.ne.s32.totalorder %s116, %s118
      %p122 = scmp.eq.s32.totalorder %s19, 0
      %p123 = por %p121, %p122
      %p124 = scmp.ne.s32.totalorder %s116, %s118
      %p125 = scmp.eq.s32.totalorder %s24, 1
      %p126 = por %p124, %p125
      %p127 = scmp.ne.s32.totalorder %s118, %s119
      %p128 = scmp.eq.s32.totalorder %s24, 0
      %p129 = por %p127, %p128
      %p130 = scmp.ne.s32.totalorder %s118, %s119
      %p131 = scmp.eq.s32.totalorder %s25, 1
      %p132 = por %p130, %p131
      %p134 = scmp.ne.s32.totalorder %s119, %s133
      %p135 = scmp.eq.s32.totalorder %s25, 0
      %p136 = por %p134, %p135
      %s137 = ssub.s32 %s19, %s26
      %p138 = scmp.eq.s32.totalorder %s137, 0
      %s140 = sadd.s32 %s139, 1
      %s141 = scalar_select %p138, %s139, %s140
      %p144 = pneg %p138
      %p145 = scmp.eq.s32.totalorder %s19, 1
      %p146 = por %p144, %p145
      %p147 = scmp.ne.s32.totalorder %s139, %s142
      %p148 = scmp.eq.s32.totalorder %s19, 0
      %p149 = por %p147, %p148
      %p150 = scmp.ne.s32.totalorder %s139, %s142
      %p151 = scmp.eq.s32.totalorder %s24, 1
      %p152 = por %p150, %p151
      %p153 = scmp.ne.s32.totalorder %s142, %s143
      %p154 = scmp.eq.s32.totalorder %s24, 0
      %p155 = por %p153, %p154
      %p156 = scmp.ne.s32.totalorder %s142, %s143
      %p157 = scmp.eq.s32.totalorder %s25, 1
      %p158 = por %p156, %p157
      %p160 = scmp.ne.s32.totalorder %s143, %s159
      %p161 = scmp.eq.s32.totalorder %s25, 0
      %p162 = por %p160, %p161
      %s163 = ssub.s32 %s19, %s26
      %p164 = scmp.eq.s32.totalorder %s163, 0
      %s166 = sadd.s32 %s165, 1
      %s167 = scalar_select %p164, %s165, %s166
      %p170 = pneg %p164
      %p171 = scmp.eq.s32.totalorder %s19, 1
      %p172 = por %p170, %p171
      %p173 = scmp.ne.s32.totalorder %s165, %s168
      %p174 = scmp.eq.s32.totalorder %s19, 0
      %p175 = por %p173, %p174
      %p176 = scmp.ne.s32.totalorder %s165, %s168
      %p177 = scmp.eq.s32.totalorder %s24, 1
      %p178 = por %p176, %p177
      %p179 = scmp.ne.s32.totalorder %s168, %s169
      %p180 = scmp.eq.s32.totalorder %s24, 0
      %p181 = por %p179, %p180
      %p182 = scmp.ne.s32.totalorder %s168, %s169
      %p183 = scmp.eq.s32.totalorder %s25, 1
      %p184 = por %p182, %p183
      %p186 = scmp.ne.s32.totalorder %s169, %s185
      %p187 = scmp.eq.s32.totalorder %s25, 0
      %p188 = por %p186, %p187
      %p189 = scmp.le.s32.totalorder 1, %s19
      %p190 = scmp.lt.s32.totalorder %s19, 3
      %p191 = pnand %p189, %p190
      %p192 = pneg %p191
      // Predicated region
      $region9: #{tpu_custom_call.1} parent=5 // pred_check
        _
      $region10: #{tpu_custom_call.1} parent=5 // pred_check_branch
        %194 = sbr.rel (%p191) target = $region12
      $region11: #{tpu_custom_call.1} parent=5 // pred_region
        %s195 = ssub.s32 %s19, 1
        // Predicated region
        $region13: #{tpu_custom_call.1} parent=11 // pred_check
          %p196 = pneg %p66
        $region14: #{tpu_custom_call.1} parent=11 // pred_check_branch
          %198 = sbr.rel (%p196) target = $region16
        $region15: #{tpu_custom_call.1} parent=11 // pred_region
          _
        $region16: #{tpu_custom_call.1} parent=11 // pred_fallthru
          _
        // Predicated region
        $region17: #{tpu_custom_call.1} parent=11 // pred_check
          %p199 = pneg %p87
        $region18: #{tpu_custom_call.1} parent=11 // pred_check_branch
          %201 = sbr.rel (%p199) target = $region20
        $region19: #{tpu_custom_call.1} parent=11 // pred_region
          _
        $region20: #{tpu_custom_call.1} parent=11 // pred_fallthru
          _
        // Predicated region
        $region21: #{tpu_custom_call.1} parent=11 // pred_check
          %p202 = pneg %p108
        $region22: #{tpu_custom_call.1} parent=11 // pred_check_branch
          %204 = sbr.rel (%p202) target = $region24
        $region23: #{tpu_custom_call.1} parent=11 // pred_region
          _
        $region24: #{tpu_custom_call.1} parent=11 // pred_fallthru
          _
        // Predicated region
        $region25: #{tpu_custom_call.1} parent=11 // pred_check
          %p205 = pneg %p129
        $region26: #{tpu_custom_call.1} parent=11 // pred_check_branch
          %207 = sbr.rel (%p205) target = $region28
        $region27: #{tpu_custom_call.1} parent=11 // pred_region
          _
        $region28: #{tpu_custom_call.1} parent=11 // pred_fallthru
          _
      $region12: #{tpu_custom_call.1} parent=5 // pred_fallthru
        _
      %p208 = scmp.lt.s32.totalorder %s19, 2
      // Predicated region
      $region29: #{tpu_custom_call.1} parent=5 // pred_check
        %p209 = pneg %p208
      $region30: #{tpu_custom_call.1} parent=5 // pred_check_branch
        %211 = sbr.rel (%p209) target = $region32
      $region31: #{tpu_custom_call.1} parent=5 // pred_region
        // Predicated region
        $region33: #{tpu_custom_call.1} parent=31 // pred_check
          %p212 = pneg %p39
        $region34: #{tpu_custom_call.1} parent=31 // pred_check_branch
          %214 = sbr.rel (%p212) target = $region36
        $region35: #{tpu_custom_call.1} parent=31 // pred_region
          %p215 = scmp.lt.s32.totalorder %s19, 1
          %s216 = scalar_select %p215, %s19, 1
          %s217 = smul.addr %s216, 32
          %s218 = smul.addr %s217, 8
          %s219 = scalar_lea.vmem %s0, %s218
        $region36: #{tpu_custom_call.1} parent=31 // pred_fallthru
          _
      $region32: #{tpu_custom_call.1} parent=5 // pred_fallthru
        _
      %p220 = scmp.le.s32.totalorder 1, %s19
      %p221 = scmp.lt.s32.totalorder %s19, 3
      %p222 = pnand %p220, %p221
      %p223 = pneg %p222
      // Predicated region
      $region37: #{tpu_custom_call.1} parent=5 // pred_check
        _
      $region38: #{tpu_custom_call.1} parent=5 // pred_check_branch
        %225 = sbr.rel (%p222) target = $region40
      $region39: #{tpu_custom_call.1} parent=5 // pred_region
        %s226 = ssub.s32 %s19, 1
        %p227 = scmp.lt.s32.totalorder %s24, 1
        %s228 = scalar_select %p227, %s24, 1
        %s229 = smul.addr %s228, 32
        %s230 = smul.addr %s229, 8
        %s231 = scalar_lea.vmem %s0, %s230
        %p232 = pneg %p45
        %p233 = pneg %p42
        %p234 = pneg %p66
        %p235 = pneg %p63
        %p236 = pneg %p87
        %p237 = pneg %p84
        %p238 = pneg %p108
        %p239 = pneg %p105
        %p240 = pneg %p129
        %p241 = pneg %p126
        %p242 = pneg %p155
        %p243 = pneg %p152
        %s244 = sand.u32 %s142, 1
        %s245 = scalar_lea.sflag [#allocation4], %s244
        %s246 = sand.u32 %s142, 1
        %s247 = smul.addr %s246, 256
        %s248 = scalar_lea.vmem [#allocation3], %s247
        %p249 = pneg %p181
        %p250 = pneg %p178
        %s251 = sand.u32 %s168, 1
        %s252 = scalar_lea.sflag [#allocation6], %s251
        %s253 = sand.u32 %s168, 1
        %s254 = scalar_lea.vmem [#allocation5], %s253
        %p255 = scmp.lt.s32.totalorder %s24, 1
        %s256 = scalar_select %p255, %s24, 1
        %s257 = smul.addr %s256, 32
        %s258 = smul.addr %s257, 8
        %s259 = scalar_lea.vmem %s0, %s258
        %260 = vst [vmem:[#allocation2] sm:$0xff] 0.0
        %261 = vst [vmem:[#allocation2 + $0x8] sm:$0xff] 0.0
        %262 = vst [vmem:[#allocation2 + $0x10] sm:$0x3] 0.0
        %263 = vst [vmem:[#allocation2 + $0x18] sm:$0xff] 0.0
        %264 = vst [vmem:[#allocation2 + $0x20] sm:$0xff] 0.0
        %265 = vst [vmem:[#allocation2 + $0x28] sm:$0x3] 0.0
        %266 = vst [vmem:[#allocation2 + $0x30] sm:$0xff] 0.0
        %267 = vst [vmem:[#allocation2 + $0x38] sm:$0xff] 0.0
        %268 = vst [vmem:[#allocation2 + $0x40] sm:$0x3] 0.0
        %269 = vst [vmem:[#allocation2 + $0x48] sm:$0xff] 0.0
        %270 = vst [vmem:[#allocation2 + $0x50] sm:$0xff] 0.0
        %271 = vst [vmem:[#allocation2 + $0x58] sm:$0x3] 0.0
        %272 = vst [vmem:[#allocation2 + $0x60] sm:$0xff] 0.0
        %273 = vst [vmem:[#allocation2 + $0x68] sm:$0xff] 0.0
        %274 = vst [vmem:[#allocation2 + $0x70] sm:$0x3] 0.0
        %275 = vst [vmem:[#allocation2 + $0x78] sm:$0xff] 0.0
        %276 = vst [vmem:[#allocation2 + $0x80] sm:$0xff] 0.0
        %277 = vst [vmem:[#allocation2 + $0x88] sm:$0x3] 0.0
        %278 = vst [vmem:[#allocation2 + $0x90] sm:$0xff] 0.0
        %279 = vst [vmem:[#allocation2 + $0x98] sm:$0xff] 0.0
        %280 = vst [vmem:[#allocation2 + $0xa0] sm:$0x3] 0.0
        %281 = vst [vmem:[#allocation2 + $0xa8] sm:$0xff] 0.0
        %282 = vst [vmem:[#allocation2 + $0xb0] sm:$0xff] 0.0
        %283 = vst [vmem:[#allocation2 + $0xb8] sm:$0x3] 0.0
        %284 = vst [vmem:[#allocation2 + $0xc0] sm:$0xff] 0.0
        %285 = vst [vmem:[#allocation2 + $0xc8] sm:$0xff] 0.0
        %286 = vst [vmem:[#allocation2 + $0xd0] sm:$0x3] 0.0
        %287 = vst [vmem:[#allocation2 + $0xd8] sm:$0xff] 0.0
        %288 = vst [vmem:[#allocation2 + $0xe0] sm:$0xff] 0.0
        %289 = vst [vmem:[#allocation2 + $0xe8] sm:$0x3] 0.0
        %290 = vst [vmem:[#allocation2 + $0xf0] sm:$0xff] 0.0
        %291 = vst [vmem:[#allocation2 + $0xf8] sm:$0xff] 0.0
        %292 = vst [vmem:[#allocation2 + $0x100] sm:$0x3] 0.0
        %293 = vst [vmem:[#allocation2 + $0x108] sm:$0xff] 0.0
        %294 = vst [vmem:[#allocation2 + $0x110] sm:$0xff] 0.0
        %295 = vst [vmem:[#allocation2 + $0x118] sm:$0x3] 0.0
        %296 = vst [vmem:[#allocation2 + $0x120] sm:$0xff] 0.0
        %297 = vst [vmem:[#allocation2 + $0x128] sm:$0xff] 0.0
        %298 = vst [vmem:[#allocation2 + $0x130] sm:$0x3] 0.0
        %299 = vst [vmem:[#allocation2 + $0x138] sm:$0xff] 0.0
        %300 = vst [vmem:[#allocation2 + $0x140] sm:$0xff] 0.0
        %301 = vst [vmem:[#allocation2 + $0x148] sm:$0x3] 0.0
        %302 = vst [vmem:[#allocation2 + $0x150] sm:$0xff] 0.0
        %303 = vst [vmem:[#allocation2 + $0x158] sm:$0xff] 0.0
        %304 = vst [vmem:[#allocation2 + $0x160] sm:$0x3] 0.0
        %305 = vst [vmem:[#allocation2 + $0x168] sm:$0xff] 0.0
        %306 = vst [vmem:[#allocation2 + $0x170] sm:$0xff] 0.0
        %307 = vst [vmem:[#allocation2 + $0x178] sm:$0x3] 0.0
        %308 = vst [vmem:[#allocation2 + $0x180] sm:$0xff] 0.0
        %309 = vst [vmem:[#allocation2 + $0x188] sm:$0xff] 0.0
        %310 = vst [vmem:[#allocation2 + $0x190] sm:$0x3] 0.0
        %311 = vst [vmem:[#allocation2 + $0x198] sm:$0xff] 0.0
        %312 = vst [vmem:[#allocation2 + $0x1a0] sm:$0xff] 0.0
        %313 = vst [vmem:[#allocation2 + $0x1a8] sm:$0x3] 0.0
        %v314 = vld [vmem:[%s259] sm:$0xff]
        %v315 = vld [vmem:[%s259 + $0x8] sm:$0xff]
        %v316 = vld [vmem:[%s259 + $0x10] sm:$0xff]
        %v317 = vld [vmem:[%s259 + $0x18] sm:$0xff]
        %v318 = vld [vmem:[%s259 + $0x20] sm:$0xff]
        %v319 = vld [vmem:[%s259 + $0x28] sm:$0xff]
        %v320 = vld [vmem:[%s259 + $0x30] sm:$0xff]
        %v321 = vld [vmem:[%s259 + $0x38] sm:$0xff]
        %v322 = vld [vmem:[%s259 + $0x40] sm:$0xff]
        %v323 = vld [vmem:[%s259 + $0x48] sm:$0xff]
        %v324 = vld [vmem:[%s259 + $0x50] sm:$0xff]
        %v325 = vld [vmem:[%s259 + $0x58] sm:$0xff]
        %v326 = vld [vmem:[%s259 + $0x60] sm:$0xff]
        %v327 = vld [vmem:[%s259 + $0x68] sm:$0xff]
        %v328 = vld [vmem:[%s259 + $0x70] sm:$0xff]
        %v329 = vld [vmem:[%s259 + $0x78] sm:$0xff]
        %v330 = vld [vmem:[%s259 + $0x80] sm:$0xff]
        %v331 = vld [vmem:[%s259 + $0x88] sm:$0xff]
        %v332 = vld [vmem:[%s259 + $0x90] sm:$0xff]
        %v333 = vld [vmem:[%s259 + $0x98] sm:$0xff]
        %v334 = vld [vmem:[%s259 + $0xa0] sm:$0xff]
        %v335 = vld [vmem:[%s259 + $0xa8] sm:$0xff]
        %v336 = vld [vmem:[%s259 + $0xb0] sm:$0xff]
        %v337 = vld [vmem:[%s259 + $0xb8] sm:$0xff]
        %v338 = vld [vmem:[%s259 + $0xc0] sm:$0xff]
        %v339 = vld [vmem:[%s259 + $0xc8] sm:$0xff]
        %v340 = vld [vmem:[%s259 + $0xd0] sm:$0xff]
        %v341 = vld [vmem:[%s259 + $0xd8] sm:$0xff]
        %v342 = vld [vmem:[%s259 + $0xe0] sm:$0xff]
        %v343 = vld [vmem:[%s259 + $0xe8] sm:$0xff]
        %v344 = vld [vmem:[%s259 + $0xf0] sm:$0xff]
        %v345 = vld [vmem:[%s259 + $0xf8] sm:$0xff]
        %v346 = vld [vmem:[%s1] sm:$0xf]
        %v347 = vld [vmem:[%s2] sm:$0x1]
        %v349 = vlaneseq
        %v350 = vshrl.u32 %v349, 7
        %v351 = vsub.s32 0, %v350
        %v352 = vrot.slane %v347, %v351
        %vm354 = vcmask 31744
        %v356 = vsel %vm354, %v314, 0
        %v359 = vsel %vm354, %v315, 0
        %v362 = vsel %vm354, %v316, 0
        %v365 = vsel %vm354, %v317, 0
        %v368 = vsel %vm354, %v318, 0
        %v371 = vsel %vm354, %v319, 0
        %v374 = vsel %vm354, %v320, 0
        %v377 = vsel %vm354, %v321, 0
        %v380 = vsel %vm354, %v322, 0
        %v383 = vsel %vm354, %v323, 0
        %v386 = vsel %vm354, %v324, 0
        %v389 = vsel %vm354, %v325, 0
        %v392 = vsel %vm354, %v326, 0
        %v395 = vsel %vm354, %v327, 0
        %v398 = vsel %vm354, %v328, 0
        %v401 = vsel %vm354, %v329, 0
        %v404 = vsel %vm354, %v330, 0
        %v407 = vsel %vm354, %v331, 0
        %v410 = vsel %vm354, %v332, 0
        %v413 = vsel %vm354, %v333, 0
        %v416 = vsel %vm354, %v334, 0
        %v419 = vsel %vm354, %v335, 0
        %v422 = vsel %vm354, %v336, 0
        %v425 = vsel %vm354, %v337, 0
        %v428 = vsel %vm354, %v338, 0
        %v431 = vsel %vm354, %v339, 0
        %v434 = vsel %vm354, %v340, 0
        %v437 = vsel %vm354, %v341, 0
        %v440 = vsel %vm354, %v342, 0
        %v443 = vsel %vm354, %v343, 0
        %v446 = vsel %vm354, %v344, 0
        %v449 = vsel %vm354, %v345, 0
        %vm451 = vcmask 1043456
        %v453 = vsel %vm451, %v346, 0
        %455 = vmatprep.subr.mxu0 0.0
        %456 = vmatpush1.msra.mxu0 %v453
        %457 = vmatprep.subr.mxu0 0.0
        %458 = vmatpush1.msra.mxu0 0.0
        %459 = vmatprep.subr.mxu0 0.0
        %460 = vmatpush1.msra.mxu0 0.0
        %461 = vmatprep.subr.mxu0 0.0
        %462 = vmatpush1.msra.mxu0 0.0
        %463 = vmatprep.subr.mxu0 0.0
        %464 = vmatpush1.msra.mxu0 0.0
        %465 = vmatprep.subr.mxu0 0.0
        %466 = vmatpush1.msra.mxu0 0.0
        %467 = vmatprep.subr.mxu0 0.0
        %468 = vmatpush1.msra.mxu0 0.0
        %469 = vmatprep.subr.mxu0 0.0
        %470 = vmatpush1.msra.mxu0 0.0
        %471 = vmatprep.subr.mxu0 0.0
        %472 = vmatpush1.msra.mxu0 0.0
        %473 = vmatprep.subr.mxu0 0.0
        %474 = vmatpush1.msra.mxu0 0.0
        %475 = vmatprep.subr.mxu0 0.0
        %476 = vmatpush1.msra.mxu0 0.0
        %477 = vmatprep.subr.mxu0 0.0
        %478 = vmatpush1.msra.mxu0 0.0
        %479 = vmatprep.subr.mxu0 0.0
        %480 = vmatpush1.msra.mxu0 0.0
        %481 = vmatprep.subr.mxu0 0.0
        %482 = vmatpush1.msra.mxu0 0.0
        %483 = vmatprep.subr.mxu0 0.0
        %484 = vmatpush1.msra.mxu0 0.0
        %485 = vmatprep.subr.mxu0 0.0
        %486 = vmatpush1.msra.mxu0 0.0
        %487 = vmatprep.subr.mxu0 0.0
        %488 = vmatpush1.msra.mxu0 0.0
        %489 = vmatprep.subr.mxu0 0.0
        %490 = vmatpush1.msra.mxu0 0.0
        %491 = vmatprep.subr.mxu0 0.0
        %492 = vmatpush1.msra.mxu0 0.0
        %493 = vmatprep.subr.mxu0 0.0
        %494 = vmatpush1.msra.mxu0 0.0
        %495 = vmatprep.subr.mxu0 0.0
        %496 = vmatpush1.msra.mxu0 0.0
        %497 = vmatprep.subr.mxu0 0.0
        %498 = vmatpush1.msra.mxu0 0.0
        %499 = vmatprep.subr.mxu0 0.0
        %500 = vmatpush1.msra.mxu0 0.0
        %501 = vmatprep.subr.mxu0 0.0
        %502 = vmatpush1.msra.mxu0 0.0
        %503 = vmatprep.subr.mxu0 0.0
        %504 = vmatpush1.msra.mxu0 0.0
        %505 = vmatprep.subr.mxu0 0.0
        %506 = vmatpush1.msra.mxu0 0.0
        %507 = vmatprep.subr.mxu0 0.0
        %508 = vmatpush1.msra.mxu0 0.0
        %509 = vmatprep.subr.mxu0 0.0
        %510 = vmatpush1.msra.mxu0 0.0
        %511 = vmatprep.subr.mxu0 0.0
        %512 = vmatpush1.msra.mxu0 0.0
        %513 = vmatprep.subr.mxu0 0.0
        %514 = vmatpush1.msra.mxu0 0.0
        %515 = vmatprep.subr.mxu0 0.0
        %516 = vmatpush1.msra.mxu0 0.0
        %517 = vmatprep.subr.mxu0 0.0
        %518 = vmatpush1.msra.mxu0 0.0
        %519 = vmatprep.mubr.f32.mxu0 0.0
        %520 = vmatmul.mubr.f32.gmra.mrb[0].mxu0 %v356
        %v521 = vpop.f32.mrb[0].mxu0
        %v522 = vadd.f32 %v352, %v521
        %v523 = vpop.f32.mrb[0].mxu0
        %524 = vmatprep.mubr.f32.mxu0 0.0
        %525 = vmatmul.mubr.f32.gmra.mrb[0].mxu0 %v359
        %v526 = vpop.f32.mrb[0].mxu0
        %v527 = vadd.f32 %v352, %v526
        %v528 = vpop.f32.mrb[0].mxu0
        %529 = vmatprep.mubr.f32.mxu0 0.0
        %530 = vmatmul.mubr.f32.gmra.mrb[0].mxu0 %v362
        %v531 = vpop.f32.mrb[0].mxu0
        %v532 = vadd.f32 %v352, %v531
        %v533 = vpop.f32.mrb[0].mxu0
        %534 = vmatprep.mubr.f32.mxu0 0.0
        %535 = vmatmul.mubr.f32.gmra.mrb[0].mxu0 %v365
        %v536 = vpop.f32.mrb[0].mxu0
        %v537 = vadd.f32 %v352, %v536
        %v538 = vpop.f32.mrb[0].mxu0
        %539 = vmatprep.mubr.f32.mxu0 0.0
        %540 = vmatmul.mubr.f32.gmra.mrb[0].mxu0 %v368
        %v541 = vpop.f32.mrb[0].mxu0
        %v542 = vadd.f32 %v352, %v541
        %v543 = vpop.f32.mrb[0].mxu0
        %544 = vmatprep.mubr.f32.mxu0 0.0
        %545 = vmatmul.mubr.f32.gmra.mrb[0].mxu0 %v371
        %v546 = vpop.f32.mrb[0].mxu0
        %v547 = vadd.f32 %v352, %v546
        %v548 = vpop.f32.mrb[0].mxu0
        %549 = vmatprep.mubr.f32.mxu0 0.0
        %550 = vmatmul.mubr.f32.gmra.mrb[0].mxu0 %v374
        %v551 = vpop.f32.mrb[0].mxu0
        %v552 = vadd.f32 %v352, %v551
        %v553 = vpop.f32.mrb[0].mxu0
        %554 = vmatprep.mubr.f32.mxu0 0.0
        %555 = vmatmul.mubr.f32.gmra.mrb[0].mxu0 %v377
        %v556 = vpop.f32.mrb[0].mxu0
        %v557 = vadd.f32 %v352, %v556
        %v558 = vpop.f32.mrb[0].mxu0
        %559 = vmatprep.mubr.f32.mxu0 0.0
        %560 = vmatmul.mubr.f32.gmra.mrb[0].mxu0 %v380
        %v561 = vpop.f32.mrb[0].mxu0
        %v562 = vadd.f32 %v352, %v561
        %v563 = vpop.f32.mrb[0].mxu0
        %564 = vmatprep.mubr.f32.mxu0 0.0
        %565 = vmatmul.mubr.f32.gmra.mrb[0].mxu0 %v383
        %v566 = vpop.f32.mrb[0].mxu0
        %v567 = vadd.f32 %v352, %v566
        %v568 = vpop.f32.mrb[0].mxu0
        %569 = vmatprep.mubr.f32.mxu0 0.0
        %570 = vmatmul.mubr.f32.gmra.mrb[0].mxu0 %v386
        %v571 = vpop.f32.mrb[0].mxu0
        %v572 = vadd.f32 %v352, %v571
        %v573 = vpop.f32.mrb[0].mxu0
        %574 = vmatprep.mubr.f32.mxu0 0.0
        %575 = vmatmul.mubr.f32.gmra.mrb[0].mxu0 %v389
        %v576 = vpop.f32.mrb[0].mxu0
        %v577 = vadd.f32 %v352, %v576
        %v578 = vpop.f32.mrb[0].mxu0
        %579 = vmatprep.mubr.f32.mxu0 0.0
        %580 = vmatmul.mubr.f32.gmra.mrb[0].mxu0 %v392
        %v581 = vpop.f32.mrb[0].mxu0
        %v582 = vadd.f32 %v352, %v581
        %v583 = vpop.f32.mrb[0].mxu0
        %584 = vmatprep.mubr.f32.mxu0 0.0
        %585 = vmatmul.mubr.f32.gmra.mrb[0].mxu0 %v395
        %v586 = vpop.f32.mrb[0].mxu0
        %v587 = vadd.f32 %v352, %v586
        %v588 = vpop.f32.mrb[0].mxu0
        %589 = vmatprep.mubr.f32.mxu0 0.0
        %590 = vmatmul.mubr.f32.gmra.mrb[0].mxu0 %v398
        %v591 = vpop.f32.mrb[0].mxu0
        %v592 = vadd.f32 %v352, %v591
        %v593 = vpop.f32.mrb[0].mxu0
        %594 = vmatprep.mubr.f32.mxu0 0.0
        %595 = vmatmul.mubr.f32.gmra.mrb[0].mxu0 %v401
        %v596 = vpop.f32.mrb[0].mxu0
        %v597 = vadd.f32 %v352, %v596
        %v598 = vpop.f32.mrb[0].mxu0
        %599 = vmatprep.mubr.f32.mxu0 0.0
        %600 = vmatmul.mubr.f32.gmra.mrb[0].mxu0 %v404
        %v601 = vpop.f32.mrb[0].mxu0
        %v602 = vadd.f32 %v352, %v601
        %v603 = vpop.f32.mrb[0].mxu0
        %604 = vmatprep.mubr.f32.mxu0 0.0
        %605 = vmatmul.mubr.f32.gmra.mrb[0].mxu0 %v407
        %v606 = vpop.f32.mrb[0].mxu0
        %v607 = vadd.f32 %v352, %v606
        %v608 = vpop.f32.mrb[0].mxu0
        %609 = vmatprep.mubr.f32.mxu0 0.0
        %610 = vmatmul.mubr.f32.gmra.mrb[0].mxu0 %v410
        %v611 = vpop.f32.mrb[0].mxu0
        %v612 = vadd.f32 %v352, %v611
        %v613 = vpop.f32.mrb[0].mxu0
        %614 = vmatprep.mubr.f32.mxu0 0.0
        %615 = vmatmul.mubr.f32.gmra.mrb[0].mxu0 %v413
        %v616 = vpop.f32.mrb[0].mxu0
        %v617 = vadd.f32 %v352, %v616
        %v618 = vpop.f32.mrb[0].mxu0
        %619 = vmatprep.mubr.f32.mxu0 0.0
        %620 = vmatmul.mubr.f32.gmra.mrb[0].mxu0 %v416
        %v621 = vpop.f32.mrb[0].mxu0
        %v622 = vadd.f32 %v352, %v621
        %v623 = vpop.f32.mrb[0].mxu0
        %624 = vmatprep.mubr.f32.mxu0 0.0
        %625 = vmatmul.mubr.f32.gmra.mrb[0].mxu0 %v419
        %v626 = vpop.f32.mrb[0].mxu0
        %v627 = vadd.f32 %v352, %v626
        %v628 = vpop.f32.mrb[0].mxu0
        %629 = vmatprep.mubr.f32.mxu0 0.0
        %630 = vmatmul.mubr.f32.gmra.mrb[0].mxu0 %v422
        %v631 = vpop.f32.mrb[0].mxu0
        %v632 = vadd.f32 %v352, %v631
        %v633 = vpop.f32.mrb[0].mxu0
        %634 = vmatprep.mubr.f32.mxu0 0.0
        %635 = vmatmul.mubr.f32.gmra.mrb[0].mxu0 %v425
        %v636 = vpop.f32.mrb[0].mxu0
        %v637 = vadd.f32 %v352, %v636
        %v638 = vpop.f32.mrb[0].mxu0
        %639 = vmatprep.mubr.f32.mxu0 0.0
        %640 = vmatmul.mubr.f32.gmra.mrb[0].mxu0 %v428
        %v641 = vpop.f32.mrb[0].mxu0
        %v642 = vadd.f32 %v352, %v641
        %v643 = vpop.f32.mrb[0].mxu0
        %644 = vmatprep.mubr.f32.mxu0 0.0
        %645 = vmatmul.mubr.f32.gmra.mrb[0].mxu0 %v431
        %v646 = vpop.f32.mrb[0].mxu0
        %v647 = vadd.f32 %v352, %v646
        %v648 = vpop.f32.mrb[0].mxu0
        %649 = vmatprep.mubr.f32.mxu0 0.0
        %650 = vmatmul.mubr.f32.gmra.mrb[0].mxu0 %v434
        %v651 = vpop.f32.mrb[0].mxu0
        %v652 = vadd.f32 %v352, %v651
        %v653 = vpop.f32.mrb[0].mxu0
        %654 = vmatprep.mubr.f32.mxu0 0.0
        %655 = vmatmul.mubr.f32.gmra.mrb[0].mxu0 %v437
        %v656 = vpop.f32.mrb[0].mxu0
        %v657 = vadd.f32 %v352, %v656
        %v658 = vpop.f32.mrb[0].mxu0
        %659 = vmatprep.mubr.f32.mxu0 0.0
        %660 = vmatmul.mubr.f32.gmra.mrb[0].mxu0 %v440
        %v661 = vpop.f32.mrb[0].mxu0
        %v662 = vadd.f32 %v352, %v661
        %v663 = vpop.f32.mrb[0].mxu0
        %664 = vmatprep.mubr.f32.mxu0 0.0
        %665 = vmatmul.mubr.f32.gmra.mrb[0].mxu0 %v443
        %v666 = vpop.f32.mrb[0].mxu0
        %v667 = vadd.f32 %v352, %v666
        %v668 = vpop.f32.mrb[0].mxu0
        %669 = vmatprep.mubr.f32.mxu0 0.0
        %670 = vmatmul.mubr.f32.gmra.mrb[0].mxu0 %v446
        %v671 = vpop.f32.mrb[0].mxu0
        %v672 = vadd.f32 %v352, %v671
        %v673 = vpop.f32.mrb[0].mxu0
        %674 = vmatprep.mubr.f32.mxu0 0.0
        %675 = vmatmul.mubr.f32.gmra.mrb[0].mxu0 %v449
        %v676 = vpop.f32.mrb[0].mxu0
        %v677 = vadd.f32 %v352, %v676
        %v678 = vpop.f32.mrb[0].mxu0
        %679 = vdwg.mxu0
        %v680 = vand.u32 2147483647, %v522
        %v681 = vand.u32 2147483647, %v527
        %v682 = vand.u32 2147483647, %v532
        %v683 = vand.u32 2147483647, %v537
        %v684 = vand.u32 2147483647, %v542
        %v685 = vand.u32 2147483647, %v547
        %v686 = vand.u32 2147483647, %v552
        %v687 = vand.u32 2147483647, %v557
        %v688 = vand.u32 2147483647, %v562
        %v689 = vand.u32 2147483647, %v567
        %v690 = vand.u32 2147483647, %v572
        %v691 = vand.u32 2147483647, %v577
        %v692 = vand.u32 2147483647, %v582
        %v693 = vand.u32 2147483647, %v587
        %v694 = vand.u32 2147483647, %v592
        %v695 = vand.u32 2147483647, %v597
        %v696 = vand.u32 2147483647, %v602
        %v697 = vand.u32 2147483647, %v607
        %v698 = vand.u32 2147483647, %v612
        %v699 = vand.u32 2147483647, %v617
        %v700 = vand.u32 2147483647, %v622
        %v701 = vand.u32 2147483647, %v627
        %v702 = vand.u32 2147483647, %v632
        %v703 = vand.u32 2147483647, %v637
        %v704 = vand.u32 2147483647, %v642
        %v705 = vand.u32 2147483647, %v647
        %v706 = vand.u32 2147483647, %v652
        %v707 = vand.u32 2147483647, %v657
        %v708 = vand.u32 2147483647, %v662
        %v709 = vand.u32 2147483647, %v667
        %v710 = vand.u32 2147483647, %v672
        %v711 = vand.u32 2147483647, %v677
        %v712 = vsub.f32 0.0, %v680
        %v713 = vsub.f32 0.0, %v681
        %v714 = vsub.f32 0.0, %v682
        %v715 = vsub.f32 0.0, %v683
        %v716 = vsub.f32 0.0, %v684
        %v717 = vsub.f32 0.0, %v685
        %v718 = vsub.f32 0.0, %v686
        %v719 = vsub.f32 0.0, %v687
        %v720 = vsub.f32 0.0, %v688
        %v721 = vsub.f32 0.0, %v689
        %v722 = vsub.f32 0.0, %v690
        %v723 = vsub.f32 0.0, %v691
        %v724 = vsub.f32 0.0, %v692
        %v725 = vsub.f32 0.0, %v693
        %v726 = vsub.f32 0.0, %v694
        %v727 = vsub.f32 0.0, %v695
        %v728 = vsub.f32 0.0, %v696
        %v729 = vsub.f32 0.0, %v697
        %v730 = vsub.f32 0.0, %v698
        %v731 = vsub.f32 0.0, %v699
        %v732 = vsub.f32 0.0, %v700
        %v733 = vsub.f32 0.0, %v701
        %v734 = vsub.f32 0.0, %v702
        %v735 = vsub.f32 0.0, %v703
        %v736 = vsub.f32 0.0, %v704
        %v737 = vsub.f32 0.0, %v705
        %v738 = vsub.f32 0.0, %v706
        %v739 = vsub.f32 0.0, %v707
        %v740 = vsub.f32 0.0, %v708
        %v741 = vsub.f32 0.0, %v709
        %v742 = vsub.f32 0.0, %v710
        %v743 = vsub.f32 0.0, %v711
        %v744 = vmul.f32 %v712, 1.442695
        %v745 = vpow.pop %v744
        %v746 = vmul.f32 %v713, 1.442695
        %v747 = vpow.pop %v746
        %v748 = vmul.f32 %v714, 1.442695
        %v749 = vpow.pop %v748
        %v750 = vmul.f32 %v715, 1.442695
        %v751 = vpow.pop %v750
        %v752 = vmul.f32 %v716, 1.442695
        %v753 = vpow.pop %v752
        %v754 = vmul.f32 %v717, 1.442695
        %v755 = vpow.pop %v754
        %v756 = vmul.f32 %v718, 1.442695
        %v757 = vpow.pop %v756
        %v758 = vmul.f32 %v719, 1.442695
        %v759 = vpow.pop %v758
        %v760 = vmul.f32 %v720, 1.442695
        %v761 = vpow.pop %v760
        %v762 = vmul.f32 %v721, 1.442695
        %v763 = vpow.pop %v762
        %v764 = vmul.f32 %v722, 1.442695
        %v765 = vpow.pop %v764
        %v766 = vmul.f32 %v723, 1.442695
        %v767 = vpow.pop %v766
        %v768 = vmul.f32 %v724, 1.442695
        %v769 = vpow.pop %v768
        %v770 = vmul.f32 %v725, 1.442695
        %v771 = vpow.pop %v770
        %v772 = vmul.f32 %v726, 1.442695
        %v773 = vpow.pop %v772
        %v774 = vmul.f32 %v727, 1.442695
        %v775 = vpow.pop %v774
        %v776 = vmul.f32 %v728, 1.442695
        %v777 = vpow.pop %v776
        %v778 = vmul.f32 %v729, 1.442695
        %v779 = vpow.pop %v778
        %v780 = vmul.f32 %v730, 1.442695
        %v781 = vpow.pop %v780
        %v782 = vmul.f32 %v731, 1.442695
        %v783 = vpow.pop %v782
        %v784 = vmul.f32 %v732, 1.442695
        %v785 = vpow.pop %v784
        %v786 = vmul.f32 %v733, 1.442695
        %v787 = vpow.pop %v786
        %v788 = vmul.f32 %v734, 1.442695
        %v789 = vpow.pop %v788
        %v790 = vmul.f32 %v735, 1.442695
        %v791 = vpow.pop %v790
        %v792 = vmul.f32 %v736, 1.442695
        %v793 = vpow.pop %v792
        %v794 = vmul.f32 %v737, 1.442695
        %v795 = vpow.pop %v794
        %v796 = vmul.f32 %v738, 1.442695
        %v797 = vpow.pop %v796
        %v798 = vmul.f32 %v739, 1.442695
        %v799 = vpow.pop %v798
        %v800 = vmul.f32 %v740, 1.442695
        %v801 = vpow.pop %v800
        %v802 = vmul.f32 %v741, 1.442695
        %v803 = vpow.pop %v802
        %v804 = vmul.f32 %v742, 1.442695
        %v805 = vpow.pop %v804
        %v806 = vmul.f32 %v743, 1.442695
        %v807 = vpow.pop %v806
        %vm808 = vcmp.ge.f32.partialorder %v522, 0.0
        %vm809 = vcmp.ge.f32.partialorder %v527, 0.0
        %vm810 = vcmp.ge.f32.partialorder %v532, 0.0
        %vm811 = vcmp.ge.f32.partialorder %v537, 0.0
        %vm812 = vcmp.ge.f32.partialorder %v542, 0.0
        %vm813 = vcmp.ge.f32.partialorder %v547, 0.0
        %vm814 = vcmp.ge.f32.partialorder %v552, 0.0
        %vm815 = vcmp.ge.f32.partialorder %v557, 0.0
        %vm816 = vcmp.ge.f32.partialorder %v562, 0.0
        %vm817 = vcmp.ge.f32.partialorder %v567, 0.0
        %vm818 = vcmp.ge.f32.partialorder %v572, 0.0
        %vm819 = vcmp.ge.f32.partialorder %v577, 0.0
        %vm820 = vcmp.ge.f32.partialorder %v582, 0.0
        %vm821 = vcmp.ge.f32.partialorder %v587, 0.0
        %vm822 = vcmp.ge.f32.partialorder %v592, 0.0
        %vm823 = vcmp.ge.f32.partialorder %v597, 0.0
        %vm824 = vcmp.ge.f32.partialorder %v602, 0.0
        %vm825 = vcmp.ge.f32.partialorder %v607, 0.0
        %vm826 = vcmp.ge.f32.partialorder %v612, 0.0
        %vm827 = vcmp.ge.f32.partialorder %v617, 0.0
        %vm828 = vcmp.ge.f32.partialorder %v622, 0.0
        %vm829 = vcmp.ge.f32.partialorder %v627, 0.0
        %vm830 = vcmp.ge.f32.partialorder %v632, 0.0
        %vm831 = vcmp.ge.f32.partialorder %v637, 0.0
        %vm832 = vcmp.ge.f32.partialorder %v642, 0.0
        %vm833 = vcmp.ge.f32.partialorder %v647, 0.0
        %vm834 = vcmp.ge.f32.partialorder %v652, 0.0
        %vm835 = vcmp.ge.f32.partialorder %v657, 0.0
        %vm836 = vcmp.ge.f32.partialorder %v662, 0.0
        %vm837 = vcmp.ge.f32.partialorder %v667, 0.0
        %vm838 = vcmp.ge.f32.partialorder %v672, 0.0
        %vm839 = vcmp.ge.f32.partialorder %v677, 0.0
        %v840 = vadd.f32 %v745, 1.0
        %v841 = vadd.f32 %v747, 1.0
        %v842 = vadd.f32 %v749, 1.0
        %v843 = vadd.f32 %v751, 1.0
        %v844 = vadd.f32 %v753, 1.0
        %v845 = vadd.f32 %v755, 1.0
        %v846 = vadd.f32 %v757, 1.0
        %v847 = vadd.f32 %v759, 1.0
        %v848 = vadd.f32 %v761, 1.0
        %v849 = vadd.f32 %v763, 1.0
        %v850 = vadd.f32 %v765, 1.0
        %v851 = vadd.f32 %v767, 1.0
        %v852 = vadd.f32 %v769, 1.0
        %v853 = vadd.f32 %v771, 1.0
        %v854 = vadd.f32 %v773, 1.0
        %v855 = vadd.f32 %v775, 1.0
        %v856 = vadd.f32 %v777, 1.0
        %v857 = vadd.f32 %v779, 1.0
        %v858 = vadd.f32 %v781, 1.0
        %v859 = vadd.f32 %v783, 1.0
        %v860 = vadd.f32 %v785, 1.0
        %v861 = vadd.f32 %v787, 1.0
        %v862 = vadd.f32 %v789, 1.0
        %v863 = vadd.f32 %v791, 1.0
        %v864 = vadd.f32 %v793, 1.0
        %v865 = vadd.f32 %v795, 1.0
        %v866 = vadd.f32 %v797, 1.0
        %v867 = vadd.f32 %v799, 1.0
        %v868 = vadd.f32 %v801, 1.0
        %v869 = vadd.f32 %v803, 1.0
        %v870 = vadd.f32 %v805, 1.0
        %v871 = vadd.f32 %v807, 1.0
        %v872 = vrcp.pop %v840
        %v873 = vmul.f32 1.0, %v872
        %v874 = vrcp.pop %v841
        %v875 = vmul.f32 1.0, %v874
        %v876 = vrcp.pop %v842
        %v877 = vmul.f32 1.0, %v876
        %v878 = vrcp.pop %v843
        %v879 = vmul.f32 1.0, %v878
        %v880 = vrcp.pop %v844
        %v881 = vmul.f32 1.0, %v880
        %v882 = vrcp.pop %v845
        %v883 = vmul.f32 1.0, %v882
        %v884 = vrcp.pop %v846
        %v885 = vmul.f32 1.0, %v884
        %v886 = vrcp.pop %v847
        %v887 = vmul.f32 1.0, %v886
        %v888 = vrcp.pop %v848
        %v889 = vmul.f32 1.0, %v888
        %v890 = vrcp.pop %v849
        %v891 = vmul.f32 1.0, %v890
        %v892 = vrcp.pop %v850
        %v893 = vmul.f32 1.0, %v892
        %v894 = vrcp.pop %v851
        %v895 = vmul.f32 1.0, %v894
        %v896 = vrcp.pop %v852
        %v897 = vmul.f32 1.0, %v896
        %v898 = vrcp.pop %v853
        %v899 = vmul.f32 1.0, %v898
        %v900 = vrcp.pop %v854
        %v901 = vmul.f32 1.0, %v900
        %v902 = vrcp.pop %v855
        %v903 = vmul.f32 1.0, %v902
        %v904 = vrcp.pop %v856
        %v905 = vmul.f32 1.0, %v904
        %v906 = vrcp.pop %v857
        %v907 = vmul.f32 1.0, %v906
        %v908 = vrcp.pop %v858
        %v909 = vmul.f32 1.0, %v908
        %v910 = vrcp.pop %v859
        %v911 = vmul.f32 1.0, %v910
        %v912 = vrcp.pop %v860
        %v913 = vmul.f32 1.0, %v912
        %v914 = vrcp.pop %v861
        %v915 = vmul.f32 1.0, %v914
        %v916 = vrcp.pop %v862
        %v917 = vmul.f32 1.0, %v916
        %v918 = vrcp.pop %v863
        %v919 = vmul.f32 1.0, %v918
        %v920 = vrcp.pop %v864
        %v921 = vmul.f32 1.0, %v920
        %v922 = vrcp.pop %v865
        %v923 = vmul.f32 1.0, %v922
        %v924 = vrcp.pop %v866
        %v925 = vmul.f32 1.0, %v924
        %v926 = vrcp.pop %v867
        %v927 = vmul.f32 1.0, %v926
        %v928 = vrcp.pop %v868
        %v929 = vmul.f32 1.0, %v928
        %v930 = vrcp.pop %v869
        %v931 = vmul.f32 1.0, %v930
        %v932 = vrcp.pop %v870
        %v933 = vmul.f32 1.0, %v932
        %v934 = vrcp.pop %v871
        %v935 = vmul.f32 1.0, %v934
        %v936 = vmul.f32 %v745, %v872
        %v937 = vmul.f32 %v747, %v874
        %v938 = vmul.f32 %v749, %v876
        %v939 = vmul.f32 %v751, %v878
        %v940 = vmul.f32 %v753, %v880
        %v941 = vmul.f32 %v755, %v882
        %v942 = vmul.f32 %v757, %v884
        %v943 = vmul.f32 %v759, %v886
        %v944 = vmul.f32 %v761, %v888
        %v945 = vmul.f32 %v763, %v890
        %v946 = vmul.f32 %v765, %v892
        %v947 = vmul.f32 %v767, %v894
        %v948 = vmul.f32 %v769, %v896
        %v949 = vmul.f32 %v771, %v898
        %v950 = vmul.f32 %v773, %v900
        %v951 = vmul.f32 %v775, %v902
        %v952 = vmul.f32 %v777, %v904
        %v953 = vmul.f32 %v779, %v906
        %v954 = vmul.f32 %v781, %v908
        %v955 = vmul.f32 %v783, %v910
        %v956 = vmul.f32 %v785, %v912
        %v957 = vmul.f32 %v787, %v914
        %v958 = vmul.f32 %v789, %v916
        %v959 = vmul.f32 %v791, %v918
        %v960 = vmul.f32 %v793, %v920
        %v961 = vmul.f32 %v795, %v922
        %v962 = vmul.f32 %v797, %v924
        %v963 = vmul.f32 %v799, %v926
        %v964 = vmul.f32 %v801, %v928
        %v965 = vmul.f32 %v803, %v930
        %v966 = vmul.f32 %v805, %v932
        %v967 = vmul.f32 %v807, %v934
        %v968 = vsel %vm808, %v873, %v936
        %v969 = vsel %vm809, %v875, %v937
        %v970 = vsel %vm810, %v877, %v938
        %v971 = vsel %vm811, %v879, %v939
        %v972 = vsel %vm812, %v881, %v940
        %v973 = vsel %vm813, %v883, %v941
        %v974 = vsel %vm814, %v885, %v942
        %v975 = vsel %vm815, %v887, %v943
        %v976 = vsel %vm816, %v889, %v944
        %v977 = vsel %vm817, %v891, %v945
        %v978 = vsel %vm818, %v893, %v946
        %v979 = vsel %vm819, %v895, %v947
        %v980 = vsel %vm820, %v897, %v948
        %v981 = vsel %vm821, %v899, %v949
        %v982 = vsel %vm822, %v901, %v950
        %v983 = vsel %vm823, %v903, %v951
        %v984 = vsel %vm824, %v905, %v952
        %v985 = vsel %vm825, %v907, %v953
        %v986 = vsel %vm826, %v909, %v954
        %v987 = vsel %vm827, %v911, %v955
        %v988 = vsel %vm828, %v913, %v956
        %v989 = vsel %vm829, %v915, %v957
        %v990 = vsel %vm830, %v917, %v958
        %v991 = vsel %vm831, %v919, %v959
        %v992 = vsel %vm832, %v921, %v960
        %v993 = vsel %vm833, %v923, %v961
        %v994 = vsel %vm834, %v925, %v962
        %v995 = vsel %vm835, %v927, %v963
        %v996 = vsel %vm836, %v929, %v964
        %v997 = vsel %vm837, %v931, %v965
        %v998 = vsel %vm838, %v933, %v966
        %v999 = vsel %vm839, %v935, %v967
        %v1000 = vmul.f32 %v522, %v968
        %v1001 = vmul.f32 %v527, %v969
        %v1002 = vmul.f32 %v532, %v970
        %v1003 = vmul.f32 %v537, %v971
        %v1004 = vmul.f32 %v542, %v972
        %v1005 = vmul.f32 %v547, %v973
        %v1006 = vmul.f32 %v552, %v974
        %v1007 = vmul.f32 %v557, %v975
        %v1008 = vmul.f32 %v562, %v976
        %v1009 = vmul.f32 %v567, %v977
        %v1010 = vmul.f32 %v572, %v978
        %v1011 = vmul.f32 %v577, %v979
        %v1012 = vmul.f32 %v582, %v980
        %v1013 = vmul.f32 %v587, %v981
        %v1014 = vmul.f32 %v592, %v982
        %v1015 = vmul.f32 %v597, %v983
        %v1016 = vmul.f32 %v602, %v984
        %v1017 = vmul.f32 %v607, %v985
        %v1018 = vmul.f32 %v612, %v986
        %v1019 = vmul.f32 %v617, %v987
        %v1020 = vmul.f32 %v622, %v988
        %v1021 = vmul.f32 %v627, %v989
        %v1022 = vmul.f32 %v632, %v990
        %v1023 = vmul.f32 %v637, %v991
        %v1024 = vmul.f32 %v642, %v992
        %v1025 = vmul.f32 %v647, %v993
        %v1026 = vmul.f32 %v652, %v994
        %v1027 = vmul.f32 %v657, %v995
        %v1028 = vmul.f32 %v662, %v996
        %v1029 = vmul.f32 %v667, %v997
        %v1030 = vmul.f32 %v672, %v998
        %v1031 = vmul.f32 %v677, %v999
        %s1032 = scalar_lea.vmem [#allocation2], 24
        %1033 = vst [vmem:[%s1032 + $0x1] sm:$0xff] %v1000
        %1034 = vst [vmem:[%s1032 + $0x9] sm:$0xff] %v1001
        %1035 = vst [vmem:[%s1032 + $0x19] sm:$0xff] %v1002
        %1036 = vst [vmem:[%s1032 + $0x21] sm:$0xff] %v1003
        %1037 = vst [vmem:[%s1032 + $0x31] sm:$0xff] %v1004
        %1038 = vst [vmem:[%s1032 + $0x39] sm:$0xff] %v1005
        %1039 = vst [vmem:[%s1032 + $0x49] sm:$0xff] %v1006
        %1040 = vst [vmem:[%s1032 + $0x51] sm:$0xff] %v1007
        %1041 = vst [vmem:[%s1032 + $0x61] sm:$0xff] %v1008
        %1042 = vst [vmem:[%s1032 + $0x69] sm:$0xff] %v1009
        %1043 = vst [vmem:[%s1032 + $0x79] sm:$0xff] %v1010
        %1044 = vst [vmem:[%s1032 + $0x81] sm:$0xff] %v1011
        %1045 = vst [vmem:[%s1032 + $0x91] sm:$0xff] %v1012
        %1046 = vst [vmem:[%s1032 + $0x99] sm:$0xff] %v1013
        %1047 = vst [vmem:[%s1032 + $0xa9] sm:$0xff] %v1014
        %1048 = vst [vmem:[%s1032 + $0xb1] sm:$0xff] %v1015
        %1049 = vst [vmem:[%s1032 + $0xc1] sm:$0xff] %v1016
        %1050 = vst [vmem:[%s1032 + $0xc9] sm:$0xff] %v1017
        %1051 = vst [vmem:[%s1032 + $0xd9] sm:$0xff] %v1018
        %1052 = vst [vmem:[%s1032 + $0xe1] sm:$0xff] %v1019
        %1053 = vst [vmem:[%s1032 + $0xf1] sm:$0xff] %v1020
        %1054 = vst [vmem:[%s1032 + $0xf9] sm:$0xff] %v1021
        %1055 = vst [vmem:[%s1032 + $0x109] sm:$0xff] %v1022
        %1056 = vst [vmem:[%s1032 + $0x111] sm:$0xff] %v1023
        %1057 = vst [vmem:[%s1032 + $0x121] sm:$0xff] %v1024
        %1058 = vst [vmem:[%s1032 + $0x129] sm:$0xff] %v1025
        %1059 = vst [vmem:[%s1032 + $0x139] sm:$0xff] %v1026
        %1060 = vst [vmem:[%s1032 + $0x141] sm:$0xff] %v1027
        %1061 = vst [vmem:[%s1032 + $0x151] sm:$0xff] %v1028
        %1062 = vst [vmem:[%s1032 + $0x159] sm:$0xff] %v1029
        %1063 = vst [vmem:[%s1032 + $0x169] sm:$0xff] %v1030
        %1064 = vst [vmem:[%s1032 + $0x171] sm:$0xff] %v1031
        %v1065 = vld [vmem:[%s3] sm:$0xff]
        %v1066 = vld [vmem:[%s3 + $0x8] sm:$0x1]
        %v1067 = vld [vmem:[#allocation2] sm:$0xff]
        %v1068 = vld [vmem:[#allocation2 + $0x8] sm:$0xff]
        %v1069 = vld [vmem:[#allocation2 + $0x18] sm:$0xff]
        %v1070 = vld [vmem:[#allocation2 + $0x20] sm:$0xff]
        %v1071 = vld [vmem:[#allocation2 + $0x30] sm:$0xff]
        %v1072 = vld [vmem:[#allocation2 + $0x38] sm:$0xff]
        %v1073 = vld [vmem:[#allocation2 + $0x48] sm:$0xff]
        %v1074 = vld [vmem:[#allocation2 + $0x50] sm:$0xff]
        %v1075 = vld [vmem:[#allocation2 + $0x60] sm:$0xff]
        %v1076 = vld [vmem:[#allocation2 + $0x68] sm:$0xff]
        %v1077 = vld [vmem:[#allocation2 + $0x78] sm:$0xff]
        %v1078 = vld [vmem:[#allocation2 + $0x80] sm:$0xff]
        %v1079 = vld [vmem:[#allocation2 + $0x90] sm:$0xff]
        %v1080 = vld [vmem:[#allocation2 + $0x98] sm:$0xff]
        %v1081 = vld [vmem:[#allocation2 + $0xa8] sm:$0xff]
        %v1082 = vld [vmem:[#allocation2 + $0xb0] sm:$0xff]
        %v1083 = vld [vmem:[#allocation2 + $0xc0] sm:$0xff]
        %v1084 = vld [vmem:[#allocation2 + $0xc8] sm:$0xff]
        %v1085 = vld [vmem:[#allocation2 + $0xd8] sm:$0xff]
        %v1086 = vld [vmem:[#allocation2 + $0xe0] sm:$0xff]
        %v1087 = vld [vmem:[#allocation2 + $0xf0] sm:$0xff]
        %v1088 = vld [vmem:[#allocation2 + $0xf8] sm:$0xff]
        %v1089 = vld [vmem:[#allocation2 + $0x108] sm:$0xff]
        %v1090 = vld [vmem:[#allocation2 + $0x110] sm:$0xff]
        %v1091 = vld [vmem:[#allocation2 + $0x120] sm:$0xff]
        %v1092 = vld [vmem:[#allocation2 + $0x128] sm:$0xff]
        %v1093 = vld [vmem:[#allocation2 + $0x138] sm:$0xff]
        %v1094 = vld [vmem:[#allocation2 + $0x140] sm:$0xff]
        %v1095 = vld [vmem:[#allocation2 + $0x150] sm:$0xff]
        %v1096 = vld [vmem:[#allocation2 + $0x158] sm:$0xff]
        %v1097 = vld [vmem:[#allocation2 + $0x168] sm:$0xff]
        %v1098 = vld [vmem:[#allocation2 + $0x170] sm:$0xff]
        %v1099 = vld [vmem:[#allocation2 + $0x180] sm:$0xff]
        %v1100 = vld [vmem:[#allocation2 + $0x188] sm:$0xff]
        %v1101 = vld [vmem:[#allocation2 + $0x198] sm:$0xff]
        %v1102 = vld [vmem:[#allocation2 + $0x1a0] sm:$0xff]
        %v1103 = vlaneseq
        %v1104 = vshrl.u32 %v1103, 7
        %v1105 = vsub.s32 0, %v1104
        %v1106 = vrot.slane %v1065, %v1105
        %v1107 = vmul.f32 %v1067, %v1106
        %v1108 = vmul.f32 %v1068, %v1106
        %v1109 = vmul.f32 %v1069, %v1106
        %v1110 = vmul.f32 %v1070, %v1106
        %v1111 = vmul.f32 %v1071, %v1106
        %v1112 = vmul.f32 %v1072, %v1106
        %v1113 = vmul.f32 %v1073, %v1106
        %v1114 = vmul.f32 %v1074, %v1106
        %v1115 = vmul.f32 %v1075, %v1106
        %v1116 = vmul.f32 %v1076, %v1106
        %v1117 = vmul.f32 %v1077, %v1106
        %v1118 = vmul.f32 %v1078, %v1106
        %v1119 = vmul.f32 %v1079, %v1106
        %v1120 = vmul.f32 %v1080, %v1106
        %v1121 = vmul.f32 %v1081, %v1106
        %v1122 = vmul.f32 %v1082, %v1106
        %v1123 = vmul.f32 %v1083, %v1106
        %v1124 = vmul.f32 %v1084, %v1106
        %v1125 = vmul.f32 %v1085, %v1106
        %v1126 = vmul.f32 %v1086, %v1106
        %v1127 = vmul.f32 %v1087, %v1106
        %v1128 = vmul.f32 %v1088, %v1106
        %v1129 = vmul.f32 %v1089, %v1106
        %v1130 = vmul.f32 %v1090, %v1106
        %v1131 = vmul.f32 %v1091, %v1106
        %v1132 = vmul.f32 %v1092, %v1106
        %v1133 = vmul.f32 %v1093, %v1106
        %v1134 = vmul.f32 %v1094, %v1106
        %v1135 = vmul.f32 %v1095, %v1106
        %v1136 = vmul.f32 %v1096, %v1106
        %v1137 = vmul.f32 %v1097, %v1106
        %v1138 = vmul.f32 %v1098, %v1106
        %v1139 = vadd.f32 %v1107, 0.0
        %v1140 = vadd.f32 %v1108, 0.0
        %v1141 = vadd.f32 %v1109, 0.0
        %v1142 = vadd.f32 %v1110, 0.0
        %v1143 = vadd.f32 %v1111, 0.0
        %v1144 = vadd.f32 %v1112, 0.0
        %v1145 = vadd.f32 %v1113, 0.0
        %v1146 = vadd.f32 %v1114, 0.0
        %v1147 = vadd.f32 %v1115, 0.0
        %v1148 = vadd.f32 %v1116, 0.0
        %v1149 = vadd.f32 %v1117, 0.0
        %v1150 = vadd.f32 %v1118, 0.0
        %v1151 = vadd.f32 %v1119, 0.0
        %v1152 = vadd.f32 %v1120, 0.0
        %v1153 = vadd.f32 %v1121, 0.0
        %v1154 = vadd.f32 %v1122, 0.0
        %v1155 = vadd.f32 %v1123, 0.0
        %v1156 = vadd.f32 %v1124, 0.0
        %v1157 = vadd.f32 %v1125, 0.0
        %v1158 = vadd.f32 %v1126, 0.0
        %v1159 = vadd.f32 %v1127, 0.0
        %v1160 = vadd.f32 %v1128, 0.0
        %v1161 = vadd.f32 %v1129, 0.0
        %v1162 = vadd.f32 %v1130, 0.0
        %v1163 = vadd.f32 %v1131, 0.0
        %v1164 = vadd.f32 %v1132, 0.0
        %v1165 = vadd.f32 %v1133, 0.0
        %v1166 = vadd.f32 %v1134, 0.0
        %v1167 = vadd.f32 %v1135, 0.0
        %v1168 = vadd.f32 %v1136, 0.0
        %v1169 = vadd.f32 %v1137, 0.0
        %v1170 = vadd.f32 %v1138, 0.0
        %v1171 = vlaneseq
        %v1172 = vshrl.u32 %v1171, 7
        %v1173 = vsub.s32 3, %v1172
        %v1174 = vrot.slane %v1065, %v1173
        %v1175 = vmul.f32 %v1069, %v1174
        %v1176 = vmul.f32 %v1070, %v1174
        %v1177 = vmul.f32 %v1071, %v1174
        %v1178 = vmul.f32 %v1072, %v1174
        %v1179 = vmul.f32 %v1073, %v1174
        %v1180 = vmul.f32 %v1074, %v1174
        %v1181 = vmul.f32 %v1075, %v1174
        %v1182 = vmul.f32 %v1076, %v1174
        %v1183 = vmul.f32 %v1077, %v1174
        %v1184 = vmul.f32 %v1078, %v1174
        %v1185 = vmul.f32 %v1079, %v1174
        %v1186 = vmul.f32 %v1080, %v1174
        %v1187 = vmul.f32 %v1081, %v1174
        %v1188 = vmul.f32 %v1082, %v1174
        %v1189 = vmul.f32 %v1083, %v1174
        %v1190 = vmul.f32 %v1084, %v1174
        %v1191 = vmul.f32 %v1085, %v1174
        %v1192 = vmul.f32 %v1086, %v1174
        %v1193 = vmul.f32 %v1087, %v1174
        %v1194 = vmul.f32 %v1088, %v1174
        %v1195 = vmul.f32 %v1089, %v1174
        %v1196 = vmul.f32 %v1090, %v1174
        %v1197 = vmul.f32 %v1091, %v1174
        %v1198 = vmul.f32 %v1092, %v1174
        %v1199 = vmul.f32 %v1093, %v1174
        %v1200 = vmul.f32 %v1094, %v1174
        %v1201 = vmul.f32 %v1095, %v1174
        %v1202 = vmul.f32 %v1096, %v1174
        %v1203 = vmul.f32 %v1097, %v1174
        %v1204 = vmul.f32 %v1098, %v1174
        %v1205 = vmul.f32 %v1099, %v1174
        %v1206 = vmul.f32 %v1100, %v1174
        %v1207 = vadd.f32 %v1139, %v1175
        %v1208 = vadd.f32 %v1140, %v1176
        %v1209 = vadd.f32 %v1141, %v1177
        %v1210 = vadd.f32 %v1142, %v1178
        %v1211 = vadd.f32 %v1143, %v1179
        %v1212 = vadd.f32 %v1144, %v1180
        %v1213 = vadd.f32 %v1145, %v1181
        %v1214 = vadd.f32 %v1146, %v1182
        %v1215 = vadd.f32 %v1147, %v1183
        %v1216 = vadd.f32 %v1148, %v1184
        %v1217 = vadd.f32 %v1149, %v1185
        %v1218 = vadd.f32 %v1150, %v1186
        %v1219 = vadd.f32 %v1151, %v1187
        %v1220 = vadd.f32 %v1152, %v1188
        %v1221 = vadd.f32 %v1153, %v1189
        %v1222 = vadd.f32 %v1154, %v1190
        %v1223 = vadd.f32 %v1155, %v1191
        %v1224 = vadd.f32 %v1156, %v1192
        %v1225 = vadd.f32 %v1157, %v1193
        %v1226 = vadd.f32 %v1158, %v1194
        %v1227 = vadd.f32 %v1159, %v1195
        %v1228 = vadd.f32 %v1160, %v1196
        %v1229 = vadd.f32 %v1161, %v1197
        %v1230 = vadd.f32 %v1162, %v1198
        %v1231 = vadd.f32 %v1163, %v1199
        %v1232 = vadd.f32 %v1164, %v1200
        %v1233 = vadd.f32 %v1165, %v1201
        %v1234 = vadd.f32 %v1166, %v1202
        %v1235 = vadd.f32 %v1167, %v1203
        %v1236 = vadd.f32 %v1168, %v1204
        %v1237 = vadd.f32 %v1169, %v1205
        %v1238 = vadd.f32 %v1170, %v1206
        %v1239 = vlaneseq
        %v1240 = vshrl.u32 %v1239, 7
        %v1241 = vsub.s32 6, %v1240
        %v1242 = vrot.slane %v1065, %v1241
        %v1243 = vmul.f32 %v1071, %v1242
        %v1244 = vmul.f32 %v1072, %v1242
        %v1245 = vmul.f32 %v1073, %v1242
        %v1246 = vmul.f32 %v1074, %v1242
        %v1247 = vmul.f32 %v1075, %v1242
        %v1248 = vmul.f32 %v1076, %v1242
        %v1249 = vmul.f32 %v1077, %v1242
        %v1250 = vmul.f32 %v1078, %v1242
        %v1251 = vmul.f32 %v1079, %v1242
        %v1252 = vmul.f32 %v1080, %v1242
        %v1253 = vmul.f32 %v1081, %v1242
        %v1254 = vmul.f32 %v1082, %v1242
        %v1255 = vmul.f32 %v1083, %v1242
        %v1256 = vmul.f32 %v1084, %v1242
        %v1257 = vmul.f32 %v1085, %v1242
        %v1258 = vmul.f32 %v1086, %v1242
        %v1259 = vmul.f32 %v1087, %v1242
        %v1260 = vmul.f32 %v1088, %v1242
        %v1261 = vmul.f32 %v1089, %v1242
        %v1262 = vmul.f32 %v1090, %v1242
        %v1263 = vmul.f32 %v1091, %v1242
        %v1264 = vmul.f32 %v1092, %v1242
        %v1265 = vmul.f32 %v1093, %v1242
        %v1266 = vmul.f32 %v1094, %v1242
        %v1267 = vmul.f32 %v1095, %v1242
        %v1268 = vmul.f32 %v1096, %v1242
        %v1269 = vmul.f32 %v1097, %v1242
        %v1270 = vmul.f32 %v1098, %v1242
        %v1271 = vmul.f32 %v1099, %v1242
        %v1272 = vmul.f32 %v1100, %v1242
        %v1273 = vmul.f32 %v1101, %v1242
        %v1274 = vmul.f32 %v1102, %v1242
        %v1275 = vadd.f32 %v1207, %v1243
        %v1276 = vadd.f32 %v1208, %v1244
        %v1277 = vadd.f32 %v1209, %v1245
        %v1278 = vadd.f32 %v1210, %v1246
        %v1279 = vadd.f32 %v1211, %v1247
        %v1280 = vadd.f32 %v1212, %v1248
        %v1281 = vadd.f32 %v1213, %v1249
        %v1282 = vadd.f32 %v1214, %v1250
        %v1283 = vadd.f32 %v1215, %v1251
        %v1284 = vadd.f32 %v1216, %v1252
        %v1285 = vadd.f32 %v1217, %v1253
        %v1286 = vadd.f32 %v1218, %v1254
        %v1287 = vadd.f32 %v1219, %v1255
        %v1288 = vadd.f32 %v1220, %v1256
        %v1289 = vadd.f32 %v1221, %v1257
        %v1290 = vadd.f32 %v1222, %v1258
        %v1291 = vadd.f32 %v1223, %v1259
        %v1292 = vadd.f32 %v1224, %v1260
        %v1293 = vadd.f32 %v1225, %v1261
        %v1294 = vadd.f32 %v1226, %v1262
        %v1295 = vadd.f32 %v1227, %v1263
        %v1296 = vadd.f32 %v1228, %v1264
        %v1297 = vadd.f32 %v1229, %v1265
        %v1298 = vadd.f32 %v1230, %v1266
        %v1299 = vadd.f32 %v1231, %v1267
        %v1300 = vadd.f32 %v1232, %v1268
        %v1301 = vadd.f32 %v1233, %v1269
        %v1302 = vadd.f32 %v1234, %v1270
        %v1303 = vadd.f32 %v1235, %v1271
        %v1304 = vadd.f32 %v1236, %v1272
        %v1305 = vadd.f32 %v1237, %v1273
        %v1306 = vadd.f32 %v1238, %v1274
        %v1307 = vld [vmem:[#allocation2 + $0x1] sm:$0xff]
        %v1308 = vld [vmem:[#allocation2 + $0x9] sm:$0xff]
        %v1309 = vld [vmem:[#allocation2 + $0x19] sm:$0xff]
        %v1310 = vld [vmem:[#allocation2 + $0x21] sm:$0xff]
        %v1311 = vld [vmem:[#allocation2 + $0x31] sm:$0xff]
        %v1312 = vld [vmem:[#allocation2 + $0x39] sm:$0xff]
        %v1313 = vld [vmem:[#allocation2 + $0x49] sm:$0xff]
        %v1314 = vld [vmem:[#allocation2 + $0x51] sm:$0xff]
        %v1315 = vld [vmem:[#allocation2 + $0x61] sm:$0xff]
        %v1316 = vld [vmem:[#allocation2 + $0x69] sm:$0xff]
        %v1317 = vld [vmem:[#allocation2 + $0x79] sm:$0xff]
        %v1318 = vld [vmem:[#allocation2 + $0x81] sm:$0xff]
        %v1319 = vld [vmem:[#allocation2 + $0x91] sm:$0xff]
        %v1320 = vld [vmem:[#allocation2 + $0x99] sm:$0xff]
        %v1321 = vld [vmem:[#allocation2 + $0xa9] sm:$0xff]
        %v1322 = vld [vmem:[#allocation2 + $0xb1] sm:$0xff]
        %v1323 = vld [vmem:[#allocation2 + $0xc1] sm:$0xff]
        %v1324 = vld [vmem:[#allocation2 + $0xc9] sm:$0xff]
        %v1325 = vld [vmem:[#allocation2 + $0xd9] sm:$0xff]
        %v1326 = vld [vmem:[#allocation2 + $0xe1] sm:$0xff]
        %v1327 = vld [vmem:[#allocation2 + $0xf1] sm:$0xff]
        %v1328 = vld [vmem:[#allocation2 + $0xf9] sm:$0xff]
        %v1329 = vld [vmem:[#allocation2 + $0x109] sm:$0xff]
        %v1330 = vld [vmem:[#allocation2 + $0x111] sm:$0xff]
        %v1331 = vld [vmem:[#allocation2 + $0x121] sm:$0xff]
        %v1332 = vld [vmem:[#allocation2 + $0x129] sm:$0xff]
        %v1333 = vld [vmem:[#allocation2 + $0x139] sm:$0xff]
        %v1334 = vld [vmem:[#allocation2 + $0x141] sm:$0xff]
        %v1335 = vld [vmem:[#allocation2 + $0x151] sm:$0xff]
        %v1336 = vld [vmem:[#allocation2 + $0x159] sm:$0xff]
        %v1337 = vld [vmem:[#allocation2 + $0x169] sm:$0xff]
        %v1338 = vld [vmem:[#allocation2 + $0x171] sm:$0xff]
        %v1339 = vld [vmem:[#allocation2 + $0x181] sm:$0xff]
        %v1340 = vld [vmem:[#allocation2 + $0x189] sm:$0xff]
        %v1341 = vld [vmem:[#allocation2 + $0x199] sm:$0xff]
        %v1342 = vld [vmem:[#allocation2 + $0x1a1] sm:$0xff]
        %v1343 = vlaneseq
        %v1344 = vshrl.u32 %v1343, 7
        %v1345 = vsub.s32 1, %v1344
        %v1346 = vrot.slane %v1065, %v1345
        %v1347 = vmul.f32 %v1307, %v1346
        %v1348 = vmul.f32 %v1308, %v1346
        %v1349 = vmul.f32 %v1309, %v1346
        %v1350 = vmul.f32 %v1310, %v1346
        %v1351 = vmul.f32 %v1311, %v1346
        %v1352 = vmul.f32 %v1312, %v1346
        %v1353 = vmul.f32 %v1313, %v1346
        %v1354 = vmul.f32 %v1314, %v1346
        %v1355 = vmul.f32 %v1315, %v1346
        %v1356 = vmul.f32 %v1316, %v1346
        %v1357 = vmul.f32 %v1317, %v1346
        %v1358 = vmul.f32 %v1318, %v1346
        %v1359 = vmul.f32 %v1319, %v1346
        %v1360 = vmul.f32 %v1320, %v1346
        %v1361 = vmul.f32 %v1321, %v1346
        %v1362 = vmul.f32 %v1322, %v1346
        %v1363 = vmul.f32 %v1323, %v1346
        %v1364 = vmul.f32 %v1324, %v1346
        %v1365 = vmul.f32 %v1325, %v1346
        %v1366 = vmul.f32 %v1326, %v1346
        %v1367 = vmul.f32 %v1327, %v1346
        %v1368 = vmul.f32 %v1328, %v1346
        %v1369 = vmul.f32 %v1329, %v1346
        %v1370 = vmul.f32 %v1330, %v1346
        %v1371 = vmul.f32 %v1331, %v1346
        %v1372 = vmul.f32 %v1332, %v1346
        %v1373 = vmul.f32 %v1333, %v1346
        %v1374 = vmul.f32 %v1334, %v1346
        %v1375 = vmul.f32 %v1335, %v1346
        %v1376 = vmul.f32 %v1336, %v1346
        %v1377 = vmul.f32 %v1337, %v1346
        %v1378 = vmul.f32 %v1338, %v1346
        %v1379 = vadd.f32 %v1275, %v1347
        %v1380 = vadd.f32 %v1276, %v1348
        %v1381 = vadd.f32 %v1277, %v1349
        %v1382 = vadd.f32 %v1278, %v1350
        %v1383 = vadd.f32 %v1279, %v1351
        %v1384 = vadd.f32 %v1280, %v1352
        %v1385 = vadd.f32 %v1281, %v1353
        %v1386 = vadd.f32 %v1282, %v1354
        %v1387 = vadd.f32 %v1283, %v1355
        %v1388 = vadd.f32 %v1284, %v1356
        %v1389 = vadd.f32 %v1285, %v1357
        %v1390 = vadd.f32 %v1286, %v1358
        %v1391 = vadd.f32 %v1287, %v1359
        %v1392 = vadd.f32 %v1288, %v1360
        %v1393 = vadd.f32 %v1289, %v1361
        %v1394 = vadd.f32 %v1290, %v1362
        %v1395 = vadd.f32 %v1291, %v1363
        %v1396 = vadd.f32 %v1292, %v1364
        %v1397 = vadd.f32 %v1293, %v1365
        %v1398 = vadd.f32 %v1294, %v1366
        %v1399 = vadd.f32 %v1295, %v1367
        %v1400 = vadd.f32 %v1296, %v1368
        %v1401 = vadd.f32 %v1297, %v1369
        %v1402 = vadd.f32 %v1298, %v1370
        %v1403 = vadd.f32 %v1299, %v1371
        %v1404 = vadd.f32 %v1300, %v1372
        %v1405 = vadd.f32 %v1301, %v1373
        %v1406 = vadd.f32 %v1302, %v1374
        %v1407 = vadd.f32 %v1303, %v1375
        %v1408 = vadd.f32 %v1304, %v1376
        %v1409 = vadd.f32 %v1305, %v1377
        %v1410 = vadd.f32 %v1306, %v1378
        %v1411 = vlaneseq
        %v1412 = vshrl.u32 %v1411, 7
        %v1413 = vsub.s32 4, %v1412
        %v1414 = vrot.slane %v1065, %v1413
        %v1415 = vmul.f32 %v1309, %v1414
        %v1416 = vmul.f32 %v1310, %v1414
        %v1417 = vmul.f32 %v1311, %v1414
        %v1418 = vmul.f32 %v1312, %v1414
        %v1419 = vmul.f32 %v1313, %v1414
        %v1420 = vmul.f32 %v1314, %v1414
        %v1421 = vmul.f32 %v1315, %v1414
        %v1422 = vmul.f32 %v1316, %v1414
        %v1423 = vmul.f32 %v1317, %v1414
        %v1424 = vmul.f32 %v1318, %v1414
        %v1425 = vmul.f32 %v1319, %v1414
        %v1426 = vmul.f32 %v1320, %v1414
        %v1427 = vmul.f32 %v1321, %v1414
        %v1428 = vmul.f32 %v1322, %v1414
        %v1429 = vmul.f32 %v1323, %v1414
        %v1430 = vmul.f32 %v1324, %v1414
        %v1431 = vmul.f32 %v1325, %v1414
        %v1432 = vmul.f32 %v1326, %v1414
        %v1433 = vmul.f32 %v1327, %v1414
        %v1434 = vmul.f32 %v1328, %v1414
        %v1435 = vmul.f32 %v1329, %v1414
        %v1436 = vmul.f32 %v1330, %v1414
        %v1437 = vmul.f32 %v1331, %v1414
        %v1438 = vmul.f32 %v1332, %v1414
        %v1439 = vmul.f32 %v1333, %v1414
        %v1440 = vmul.f32 %v1334, %v1414
        %v1441 = vmul.f32 %v1335, %v1414
        %v1442 = vmul.f32 %v1336, %v1414
        %v1443 = vmul.f32 %v1337, %v1414
        %v1444 = vmul.f32 %v1338, %v1414
        %v1445 = vmul.f32 %v1339, %v1414
        %v1446 = vmul.f32 %v1340, %v1414
        %v1447 = vadd.f32 %v1379, %v1415
        %v1448 = vadd.f32 %v1380, %v1416
        %v1449 = vadd.f32 %v1381, %v1417
        %v1450 = vadd.f32 %v1382, %v1418
        %v1451 = vadd.f32 %v1383, %v1419
        %v1452 = vadd.f32 %v1384, %v1420
        %v1453 = vadd.f32 %v1385, %v1421
        %v1454 = vadd.f32 %v1386, %v1422
        %v1455 = vadd.f32 %v1387, %v1423
        %v1456 = vadd.f32 %v1388, %v1424
        %v1457 = vadd.f32 %v1389, %v1425
        %v1458 = vadd.f32 %v1390, %v1426
        %v1459 = vadd.f32 %v1391, %v1427
        %v1460 = vadd.f32 %v1392, %v1428
        %v1461 = vadd.f32 %v1393, %v1429
        %v1462 = vadd.f32 %v1394, %v1430
        %v1463 = vadd.f32 %v1395, %v1431
        %v1464 = vadd.f32 %v1396, %v1432
        %v1465 = vadd.f32 %v1397, %v1433
        %v1466 = vadd.f32 %v1398, %v1434
        %v1467 = vadd.f32 %v1399, %v1435
        %v1468 = vadd.f32 %v1400, %v1436
        %v1469 = vadd.f32 %v1401, %v1437
        %v1470 = vadd.f32 %v1402, %v1438
        %v1471 = vadd.f32 %v1403, %v1439
        %v1472 = vadd.f32 %v1404, %v1440
        %v1473 = vadd.f32 %v1405, %v1441
        %v1474 = vadd.f32 %v1406, %v1442
        %v1475 = vadd.f32 %v1407, %v1443
        %v1476 = vadd.f32 %v1408, %v1444
        %v1477 = vadd.f32 %v1409, %v1445
        %v1478 = vadd.f32 %v1410, %v1446
        %v1479 = vlaneseq
        %v1480 = vshrl.u32 %v1479, 7
        %v1481 = vsub.s32 7, %v1480
        %v1482 = vrot.slane %v1065, %v1481
        %v1483 = vmul.f32 %v1311, %v1482
        %v1484 = vmul.f32 %v1312, %v1482
        %v1485 = vmul.f32 %v1313, %v1482
        %v1486 = vmul.f32 %v1314, %v1482
        %v1487 = vmul.f32 %v1315, %v1482
        %v1488 = vmul.f32 %v1316, %v1482
        %v1489 = vmul.f32 %v1317, %v1482
        %v1490 = vmul.f32 %v1318, %v1482
        %v1491 = vmul.f32 %v1319, %v1482
        %v1492 = vmul.f32 %v1320, %v1482
        %v1493 = vmul.f32 %v1321, %v1482
        %v1494 = vmul.f32 %v1322, %v1482
        %v1495 = vmul.f32 %v1323, %v1482
        %v1496 = vmul.f32 %v1324, %v1482
        %v1497 = vmul.f32 %v1325, %v1482
        %v1498 = vmul.f32 %v1326, %v1482
        %v1499 = vmul.f32 %v1327, %v1482
        %v1500 = vmul.f32 %v1328, %v1482
        %v1501 = vmul.f32 %v1329, %v1482
        %v1502 = vmul.f32 %v1330, %v1482
        %v1503 = vmul.f32 %v1331, %v1482
        %v1504 = vmul.f32 %v1332, %v1482
        %v1505 = vmul.f32 %v1333, %v1482
        %v1506 = vmul.f32 %v1334, %v1482
        %v1507 = vmul.f32 %v1335, %v1482
        %v1508 = vmul.f32 %v1336, %v1482
        %v1509 = vmul.f32 %v1337, %v1482
        %v1510 = vmul.f32 %v1338, %v1482
        %v1511 = vmul.f32 %v1339, %v1482
        %v1512 = vmul.f32 %v1340, %v1482
        %v1513 = vmul.f32 %v1341, %v1482
        %v1514 = vmul.f32 %v1342, %v1482
        %v1515 = vadd.f32 %v1447, %v1483
        %v1516 = vadd.f32 %v1448, %v1484
        %v1517 = vadd.f32 %v1449, %v1485
        %v1518 = vadd.f32 %v1450, %v1486
        %v1519 = vadd.f32 %v1451, %v1487
        %v1520 = vadd.f32 %v1452, %v1488
        %v1521 = vadd.f32 %v1453, %v1489
        %v1522 = vadd.f32 %v1454, %v1490
        %v1523 = vadd.f32 %v1455, %v1491
        %v1524 = vadd.f32 %v1456, %v1492
        %v1525 = vadd.f32 %v1457, %v1493
        %v1526 = vadd.f32 %v1458, %v1494
        %v1527 = vadd.f32 %v1459, %v1495
        %v1528 = vadd.f32 %v1460, %v1496
        %v1529 = vadd.f32 %v1461, %v1497
        %v1530 = vadd.f32 %v1462, %v1498
        %v1531 = vadd.f32 %v1463, %v1499
        %v1532 = vadd.f32 %v1464, %v1500
        %v1533 = vadd.f32 %v1465, %v1501
        %v1534 = vadd.f32 %v1466, %v1502
        %v1535 = vadd.f32 %v1467, %v1503
        %v1536 = vadd.f32 %v1468, %v1504
        %v1537 = vadd.f32 %v1469, %v1505
        %v1538 = vadd.f32 %v1470, %v1506
        %v1539 = vadd.f32 %v1471, %v1507
        %v1540 = vadd.f32 %v1472, %v1508
        %v1541 = vadd.f32 %v1473, %v1509
        %v1542 = vadd.f32 %v1474, %v1510
        %v1543 = vadd.f32 %v1475, %v1511
        %v1544 = vadd.f32 %v1476, %v1512
        %v1545 = vadd.f32 %v1477, %v1513
        %v1546 = vadd.f32 %v1478, %v1514
        %v1547 = vld [vmem:[#allocation2 + $0x2] sm:$0xff]
        %v1548 = vld [vmem:[#allocation2 + $0xa] sm:$0xff]
        %v1549 = vld [vmem:[#allocation2 + $0x1a] sm:$0xff]
        %v1550 = vld [vmem:[#allocation2 + $0x22] sm:$0xff]
        %v1551 = vld [vmem:[#allocation2 + $0x32] sm:$0xff]
        %v1552 = vld [vmem:[#allocation2 + $0x3a] sm:$0xff]
        %v1553 = vld [vmem:[#allocation2 + $0x4a] sm:$0xff]
        %v1554 = vld [vmem:[#allocation2 + $0x52] sm:$0xff]
        %v1555 = vld [vmem:[#allocation2 + $0x62] sm:$0xff]
        %v1556 = vld [vmem:[#allocation2 + $0x6a] sm:$0xff]
        %v1557 = vld [vmem:[#allocation2 + $0x7a] sm:$0xff]
        %v1558 = vld [vmem:[#allocation2 + $0x82] sm:$0xff]
        %v1559 = vld [vmem:[#allocation2 + $0x92] sm:$0xff]
        %v1560 = vld [vmem:[#allocation2 + $0x9a] sm:$0xff]
        %v1561 = vld [vmem:[#allocation2 + $0xaa] sm:$0xff]
        %v1562 = vld [vmem:[#allocation2 + $0xb2] sm:$0xff]
        %v1563 = vld [vmem:[#allocation2 + $0xc2] sm:$0xff]
        %v1564 = vld [vmem:[#allocation2 + $0xca] sm:$0xff]
        %v1565 = vld [vmem:[#allocation2 + $0xda] sm:$0xff]
        %v1566 = vld [vmem:[#allocation2 + $0xe2] sm:$0xff]
        %v1567 = vld [vmem:[#allocation2 + $0xf2] sm:$0xff]
        %v1568 = vld [vmem:[#allocation2 + $0xfa] sm:$0xff]
        %v1569 = vld [vmem:[#allocation2 + $0x10a] sm:$0xff]
        %v1570 = vld [vmem:[#allocation2 + $0x112] sm:$0xff]
        %v1571 = vld [vmem:[#allocation2 + $0x122] sm:$0xff]
        %v1572 = vld [vmem:[#allocation2 + $0x12a] sm:$0xff]
        %v1573 = vld [vmem:[#allocation2 + $0x13a] sm:$0xff]
        %v1574 = vld [vmem:[#allocation2 + $0x142] sm:$0xff]
        %v1575 = vld [vmem:[#allocation2 + $0x152] sm:$0xff]
        %v1576 = vld [vmem:[#allocation2 + $0x15a] sm:$0xff]
        %v1577 = vld [vmem:[#allocation2 + $0x16a] sm:$0xff]
        %v1578 = vld [vmem:[#allocation2 + $0x172] sm:$0xff]
        %v1579 = vld [vmem:[#allocation2 + $0x182] sm:$0xff]
        %v1580 = vld [vmem:[#allocation2 + $0x18a] sm:$0xff]
        %v1581 = vld [vmem:[#allocation2 + $0x19a] sm:$0xff]
        %v1582 = vld [vmem:[#allocation2 + $0x1a2] sm:$0xff]
        %v1583 = vlaneseq
        %v1584 = vshrl.u32 %v1583, 7
        %v1585 = vsub.s32 2, %v1584
        %v1586 = vrot.slane %v1065, %v1585
        %v1587 = vmul.f32 %v1547, %v1586
        %v1588 = vmul.f32 %v1548, %v1586
        %v1589 = vmul.f32 %v1549, %v1586
        %v1590 = vmul.f32 %v1550, %v1586
        %v1591 = vmul.f32 %v1551, %v1586
        %v1592 = vmul.f32 %v1552, %v1586
        %v1593 = vmul.f32 %v1553, %v1586
        %v1594 = vmul.f32 %v1554, %v1586
        %v1595 = vmul.f32 %v1555, %v1586
        %v1596 = vmul.f32 %v1556, %v1586
        %v1597 = vmul.f32 %v1557, %v1586
        %v1598 = vmul.f32 %v1558, %v1586
        %v1599 = vmul.f32 %v1559, %v1586
        %v1600 = vmul.f32 %v1560, %v1586
        %v1601 = vmul.f32 %v1561, %v1586
        %v1602 = vmul.f32 %v1562, %v1586
        %v1603 = vmul.f32 %v1563, %v1586
        %v1604 = vmul.f32 %v1564, %v1586
        %v1605 = vmul.f32 %v1565, %v1586
        %v1606 = vmul.f32 %v1566, %v1586
        %v1607 = vmul.f32 %v1567, %v1586
        %v1608 = vmul.f32 %v1568, %v1586
        %v1609 = vmul.f32 %v1569, %v1586
        %v1610 = vmul.f32 %v1570, %v1586
        %v1611 = vmul.f32 %v1571, %v1586
        %v1612 = vmul.f32 %v1572, %v1586
        %v1613 = vmul.f32 %v1573, %v1586
        %v1614 = vmul.f32 %v1574, %v1586
        %v1615 = vmul.f32 %v1575, %v1586
        %v1616 = vmul.f32 %v1576, %v1586
        %v1617 = vmul.f32 %v1577, %v1586
        %v1618 = vmul.f32 %v1578, %v1586
        %v1619 = vadd.f32 %v1515, %v1587
        %v1620 = vadd.f32 %v1516, %v1588
        %v1621 = vadd.f32 %v1517, %v1589
        %v1622 = vadd.f32 %v1518, %v1590
        %v1623 = vadd.f32 %v1519, %v1591
        %v1624 = vadd.f32 %v1520, %v1592
        %v1625 = vadd.f32 %v1521, %v1593
        %v1626 = vadd.f32 %v1522, %v1594
        %v1627 = vadd.f32 %v1523, %v1595
        %v1628 = vadd.f32 %v1524, %v1596
        %v1629 = vadd.f32 %v1525, %v1597
        %v1630 = vadd.f32 %v1526, %v1598
        %v1631 = vadd.f32 %v1527, %v1599
        %v1632 = vadd.f32 %v1528, %v1600
        %v1633 = vadd.f32 %v1529, %v1601
        %v1634 = vadd.f32 %v1530, %v1602
        %v1635 = vadd.f32 %v1531, %v1603
        %v1636 = vadd.f32 %v1532, %v1604
        %v1637 = vadd.f32 %v1533, %v1605
        %v1638 = vadd.f32 %v1534, %v1606
        %v1639 = vadd.f32 %v1535, %v1607
        %v1640 = vadd.f32 %v1536, %v1608
        %v1641 = vadd.f32 %v1537, %v1609
        %v1642 = vadd.f32 %v1538, %v1610
        %v1643 = vadd.f32 %v1539, %v1611
        %v1644 = vadd.f32 %v1540, %v1612
        %v1645 = vadd.f32 %v1541, %v1613
        %v1646 = vadd.f32 %v1542, %v1614
        %v1647 = vadd.f32 %v1543, %v1615
        %v1648 = vadd.f32 %v1544, %v1616
        %v1649 = vadd.f32 %v1545, %v1617
        %v1650 = vadd.f32 %v1546, %v1618
        %v1651 = vlaneseq
        %v1652 = vshrl.u32 %v1651, 7
        %v1653 = vsub.s32 5, %v1652
        %v1654 = vrot.slane %v1065, %v1653
        %v1655 = vmul.f32 %v1549, %v1654
        %v1656 = vmul.f32 %v1550, %v1654
        %v1657 = vmul.f32 %v1551, %v1654
        %v1658 = vmul.f32 %v1552, %v1654
        %v1659 = vmul.f32 %v1553, %v1654
        %v1660 = vmul.f32 %v1554, %v1654
        %v1661 = vmul.f32 %v1555, %v1654
        %v1662 = vmul.f32 %v1556, %v1654
        %v1663 = vmul.f32 %v1557, %v1654
        %v1664 = vmul.f32 %v1558, %v1654
        %v1665 = vmul.f32 %v1559, %v1654
        %v1666 = vmul.f32 %v1560, %v1654
        %v1667 = vmul.f32 %v1561, %v1654
        %v1668 = vmul.f32 %v1562, %v1654
        %v1669 = vmul.f32 %v1563, %v1654
        %v1670 = vmul.f32 %v1564, %v1654
        %v1671 = vmul.f32 %v1565, %v1654
        %v1672 = vmul.f32 %v1566, %v1654
        %v1673 = vmul.f32 %v1567, %v1654
        %v1674 = vmul.f32 %v1568, %v1654
        %v1675 = vmul.f32 %v1569, %v1654
        %v1676 = vmul.f32 %v1570, %v1654
        %v1677 = vmul.f32 %v1571, %v1654
        %v1678 = vmul.f32 %v1572, %v1654
        %v1679 = vmul.f32 %v1573, %v1654
        %v1680 = vmul.f32 %v1574, %v1654
        %v1681 = vmul.f32 %v1575, %v1654
        %v1682 = vmul.f32 %v1576, %v1654
        %v1683 = vmul.f32 %v1577, %v1654
        %v1684 = vmul.f32 %v1578, %v1654
        %v1685 = vmul.f32 %v1579, %v1654
        %v1686 = vmul.f32 %v1580, %v1654
        %v1687 = vadd.f32 %v1619, %v1655
        %v1688 = vadd.f32 %v1620, %v1656
        %v1689 = vadd.f32 %v1621, %v1657
        %v1690 = vadd.f32 %v1622, %v1658
        %v1691 = vadd.f32 %v1623, %v1659
        %v1692 = vadd.f32 %v1624, %v1660
        %v1693 = vadd.f32 %v1625, %v1661
        %v1694 = vadd.f32 %v1626, %v1662
        %v1695 = vadd.f32 %v1627, %v1663
        %v1696 = vadd.f32 %v1628, %v1664
        %v1697 = vadd.f32 %v1629, %v1665
        %v1698 = vadd.f32 %v1630, %v1666
        %v1699 = vadd.f32 %v1631, %v1667
        %v1700 = vadd.f32 %v1632, %v1668
        %v1701 = vadd.f32 %v1633, %v1669
        %v1702 = vadd.f32 %v1634, %v1670
        %v1703 = vadd.f32 %v1635, %v1671
        %v1704 = vadd.f32 %v1636, %v1672
        %v1705 = vadd.f32 %v1637, %v1673
        %v1706 = vadd.f32 %v1638, %v1674
        %v1707 = vadd.f32 %v1639, %v1675
        %v1708 = vadd.f32 %v1640, %v1676
        %v1709 = vadd.f32 %v1641, %v1677
        %v1710 = vadd.f32 %v1642, %v1678
        %v1711 = vadd.f32 %v1643, %v1679
        %v1712 = vadd.f32 %v1644, %v1680
        %v1713 = vadd.f32 %v1645, %v1681
        %v1714 = vadd.f32 %v1646, %v1682
        %v1715 = vadd.f32 %v1647, %v1683
        %v1716 = vadd.f32 %v1648, %v1684
        %v1717 = vadd.f32 %v1649, %v1685
        %v1718 = vadd.f32 %v1650, %v1686
        %v1719 = vlaneseq
        %v1720 = vshrl.u32 %v1719, 7
        %v1721 = vsub.s32 0, %v1720
        %v1722 = vrot.slane %v1066, %v1721
        %v1723 = vmul.f32 %v1551, %v1722
        %v1724 = vmul.f32 %v1552, %v1722
        %v1725 = vmul.f32 %v1553, %v1722
        %v1726 = vmul.f32 %v1554, %v1722
        %v1727 = vmul.f32 %v1555, %v1722
        %v1728 = vmul.f32 %v1556, %v1722
        %v1729 = vmul.f32 %v1557, %v1722
        %v1730 = vmul.f32 %v1558, %v1722
        %v1731 = vmul.f32 %v1559, %v1722
        %v1732 = vmul.f32 %v1560, %v1722
        %v1733 = vmul.f32 %v1561, %v1722
        %v1734 = vmul.f32 %v1562, %v1722
        %v1735 = vmul.f32 %v1563, %v1722
        %v1736 = vmul.f32 %v1564, %v1722
        %v1737 = vmul.f32 %v1565, %v1722
        %v1738 = vmul.f32 %v1566, %v1722
        %v1739 = vmul.f32 %v1567, %v1722
        %v1740 = vmul.f32 %v1568, %v1722
        %v1741 = vmul.f32 %v1569, %v1722
        %v1742 = vmul.f32 %v1570, %v1722
        %v1743 = vmul.f32 %v1571, %v1722
        %v1744 = vmul.f32 %v1572, %v1722
        %v1745 = vmul.f32 %v1573, %v1722
        %v1746 = vmul.f32 %v1574, %v1722
        %v1747 = vmul.f32 %v1575, %v1722
        %v1748 = vmul.f32 %v1576, %v1722
        %v1749 = vmul.f32 %v1577, %v1722
        %v1750 = vmul.f32 %v1578, %v1722
        %v1751 = vmul.f32 %v1579, %v1722
        %v1752 = vmul.f32 %v1580, %v1722
        %v1753 = vmul.f32 %v1581, %v1722
        %v1754 = vmul.f32 %v1582, %v1722
        %v1755 = vadd.f32 %v1687, %v1723
        %v1756 = vadd.f32 %v1688, %v1724
        %v1757 = vadd.f32 %v1689, %v1725
        %v1758 = vadd.f32 %v1690, %v1726
        %v1759 = vadd.f32 %v1691, %v1727
        %v1760 = vadd.f32 %v1692, %v1728
        %v1761 = vadd.f32 %v1693, %v1729
        %v1762 = vadd.f32 %v1694, %v1730
        %v1763 = vadd.f32 %v1695, %v1731
        %v1764 = vadd.f32 %v1696, %v1732
        %v1765 = vadd.f32 %v1697, %v1733
        %v1766 = vadd.f32 %v1698, %v1734
        %v1767 = vadd.f32 %v1699, %v1735
        %v1768 = vadd.f32 %v1700, %v1736
        %v1769 = vadd.f32 %v1701, %v1737
        %v1770 = vadd.f32 %v1702, %v1738
        %v1771 = vadd.f32 %v1703, %v1739
        %v1772 = vadd.f32 %v1704, %v1740
        %v1773 = vadd.f32 %v1705, %v1741
        %v1774 = vadd.f32 %v1706, %v1742
        %v1775 = vadd.f32 %v1707, %v1743
        %v1776 = vadd.f32 %v1708, %v1744
        %v1777 = vadd.f32 %v1709, %v1745
        %v1778 = vadd.f32 %v1710, %v1746
        %v1779 = vadd.f32 %v1711, %v1747
        %v1780 = vadd.f32 %v1712, %v1748
        %v1781 = vadd.f32 %v1713, %v1749
        %v1782 = vadd.f32 %v1714, %v1750
        %v1783 = vadd.f32 %v1715, %v1751
        %v1784 = vadd.f32 %v1716, %v1752
        %v1785 = vadd.f32 %v1717, %v1753
        %v1786 = vadd.f32 %v1718, %v1754
        %v1787 = vld [vmem:[%s4] sm:$0x1]
        %v1789 = vlaneseq
        %v1790 = vshrl.u32 %v1789, 7
        %v1791 = vsub.s32 0, %v1790
        %v1792 = vrot.slane %v1787, %v1791
        %v1794 = vadd.f32 %v1755, %v1792
        %v1795 = vadd.f32 %v1756, %v1792
        %v1796 = vadd.f32 %v1757, %v1792
        %v1797 = vadd.f32 %v1758, %v1792
        %v1798 = vadd.f32 %v1759, %v1792
        %v1799 = vadd.f32 %v1760, %v1792
        %v1800 = vadd.f32 %v1761, %v1792
        %v1801 = vadd.f32 %v1762, %v1792
        %v1802 = vadd.f32 %v1763, %v1792
        %v1803 = vadd.f32 %v1764, %v1792
        %v1804 = vadd.f32 %v1765, %v1792
        %v1805 = vadd.f32 %v1766, %v1792
        %v1806 = vadd.f32 %v1767, %v1792
        %v1807 = vadd.f32 %v1768, %v1792
        %v1808 = vadd.f32 %v1769, %v1792
        %v1809 = vadd.f32 %v1770, %v1792
        %v1810 = vadd.f32 %v1771, %v1792
        %v1811 = vadd.f32 %v1772, %v1792
        %v1812 = vadd.f32 %v1773, %v1792
        %v1813 = vadd.f32 %v1774, %v1792
        %v1814 = vadd.f32 %v1775, %v1792
        %v1815 = vadd.f32 %v1776, %v1792
        %v1816 = vadd.f32 %v1777, %v1792
        %v1817 = vadd.f32 %v1778, %v1792
        %v1818 = vadd.f32 %v1779, %v1792
        %v1819 = vadd.f32 %v1780, %v1792
        %v1820 = vadd.f32 %v1781, %v1792
        %v1821 = vadd.f32 %v1782, %v1792
        %v1822 = vadd.f32 %v1783, %v1792
        %v1823 = vadd.f32 %v1784, %v1792
        %v1824 = vadd.f32 %v1785, %v1792
        %v1825 = vadd.f32 %v1786, %v1792
        %v1826 = vand.u32 2147483647, %v1794
        %v1827 = vand.u32 2147483647, %v1795
        %v1828 = vand.u32 2147483647, %v1796
        %v1829 = vand.u32 2147483647, %v1797
        %v1830 = vand.u32 2147483647, %v1798
        %v1831 = vand.u32 2147483647, %v1799
        %v1832 = vand.u32 2147483647, %v1800
        %v1833 = vand.u32 2147483647, %v1801
        %v1834 = vand.u32 2147483647, %v1802
        %v1835 = vand.u32 2147483647, %v1803
        %v1836 = vand.u32 2147483647, %v1804
        %v1837 = vand.u32 2147483647, %v1805
        %v1838 = vand.u32 2147483647, %v1806
        %v1839 = vand.u32 2147483647, %v1807
        %v1840 = vand.u32 2147483647, %v1808
        %v1841 = vand.u32 2147483647, %v1809
        %v1842 = vand.u32 2147483647, %v1810
        %v1843 = vand.u32 2147483647, %v1811
        %v1844 = vand.u32 2147483647, %v1812
        %v1845 = vand.u32 2147483647, %v1813
        %v1846 = vand.u32 2147483647, %v1814
        %v1847 = vand.u32 2147483647, %v1815
        %v1848 = vand.u32 2147483647, %v1816
        %v1849 = vand.u32 2147483647, %v1817
        %v1850 = vand.u32 2147483647, %v1818
        %v1851 = vand.u32 2147483647, %v1819
        %v1852 = vand.u32 2147483647, %v1820
        %v1853 = vand.u32 2147483647, %v1821
        %v1854 = vand.u32 2147483647, %v1822
        %v1855 = vand.u32 2147483647, %v1823
        %v1856 = vand.u32 2147483647, %v1824
        %v1857 = vand.u32 2147483647, %v1825
        %v1858 = vsub.f32 0.0, %v1826
        %v1859 = vsub.f32 0.0, %v1827
        %v1860 = vsub.f32 0.0, %v1828
        %v1861 = vsub.f32 0.0, %v1829
        %v1862 = vsub.f32 0.0, %v1830
        %v1863 = vsub.f32 0.0, %v1831
        %v1864 = vsub.f32 0.0, %v1832
        %v1865 = vsub.f32 0.0, %v1833
        %v1866 = vsub.f32 0.0, %v1834
        %v1867 = vsub.f32 0.0, %v1835
        %v1868 = vsub.f32 0.0, %v1836
        %v1869 = vsub.f32 0.0, %v1837
        %v1870 = vsub.f32 0.0, %v1838
        %v1871 = vsub.f32 0.0, %v1839
        %v1872 = vsub.f32 0.0, %v1840
        %v1873 = vsub.f32 0.0, %v1841
        %v1874 = vsub.f32 0.0, %v1842
        %v1875 = vsub.f32 0.0, %v1843
        %v1876 = vsub.f32 0.0, %v1844
        %v1877 = vsub.f32 0.0, %v1845
        %v1878 = vsub.f32 0.0, %v1846
        %v1879 = vsub.f32 0.0, %v1847
        %v1880 = vsub.f32 0.0, %v1848
        %v1881 = vsub.f32 0.0, %v1849
        %v1882 = vsub.f32 0.0, %v1850
        %v1883 = vsub.f32 0.0, %v1851
        %v1884 = vsub.f32 0.0, %v1852
        %v1885 = vsub.f32 0.0, %v1853
        %v1886 = vsub.f32 0.0, %v1854
        %v1887 = vsub.f32 0.0, %v1855
        %v1888 = vsub.f32 0.0, %v1856
        %v1889 = vsub.f32 0.0, %v1857
        %v1890 = vmul.f32 %v1858, 1.442695
        %v1891 = vpow.pop %v1890
        %v1892 = vmul.f32 %v1859, 1.442695
        %v1893 = vpow.pop %v1892
        %v1894 = vmul.f32 %v1860, 1.442695
        %v1895 = vpow.pop %v1894
        %v1896 = vmul.f32 %v1861, 1.442695
        %v1897 = vpow.pop %v1896
        %v1898 = vmul.f32 %v1862, 1.442695
        %v1899 = vpow.pop %v1898
        %v1900 = vmul.f32 %v1863, 1.442695
        %v1901 = vpow.pop %v1900
        %v1902 = vmul.f32 %v1864, 1.442695
        %v1903 = vpow.pop %v1902
        %v1904 = vmul.f32 %v1865, 1.442695
        %v1905 = vpow.pop %v1904
        %v1906 = vmul.f32 %v1866, 1.442695
        %v1907 = vpow.pop %v1906
        %v1908 = vmul.f32 %v1867, 1.442695
        %v1909 = vpow.pop %v1908
        %v1910 = vmul.f32 %v1868, 1.442695
        %v1911 = vpow.pop %v1910
        %v1912 = vmul.f32 %v1869, 1.442695
        %v1913 = vpow.pop %v1912
        %v1914 = vmul.f32 %v1870, 1.442695
        %v1915 = vpow.pop %v1914
        %v1916 = vmul.f32 %v1871, 1.442695
        %v1917 = vpow.pop %v1916
        %v1918 = vmul.f32 %v1872, 1.442695
        %v1919 = vpow.pop %v1918
        %v1920 = vmul.f32 %v1873, 1.442695
        %v1921 = vpow.pop %v1920
        %v1922 = vmul.f32 %v1874, 1.442695
        %v1923 = vpow.pop %v1922
        %v1924 = vmul.f32 %v1875, 1.442695
        %v1925 = vpow.pop %v1924
        %v1926 = vmul.f32 %v1876, 1.442695
        %v1927 = vpow.pop %v1926
        %v1928 = vmul.f32 %v1877, 1.442695
        %v1929 = vpow.pop %v1928
        %v1930 = vmul.f32 %v1878, 1.442695
        %v1931 = vpow.pop %v1930
        %v1932 = vmul.f32 %v1879, 1.442695
        %v1933 = vpow.pop %v1932
        %v1934 = vmul.f32 %v1880, 1.442695
        %v1935 = vpow.pop %v1934
        %v1936 = vmul.f32 %v1881, 1.442695
        %v1937 = vpow.pop %v1936
        %v1938 = vmul.f32 %v1882, 1.442695
        %v1939 = vpow.pop %v1938
        %v1940 = vmul.f32 %v1883, 1.442695
        %v1941 = vpow.pop %v1940
        %v1942 = vmul.f32 %v1884, 1.442695
        %v1943 = vpow.pop %v1942
        %v1944 = vmul.f32 %v1885, 1.442695
        %v1945 = vpow.pop %v1944
        %v1946 = vmul.f32 %v1886, 1.442695
        %v1947 = vpow.pop %v1946
        %v1948 = vmul.f32 %v1887, 1.442695
        %v1949 = vpow.pop %v1948
        %v1950 = vmul.f32 %v1888, 1.442695
        %v1951 = vpow.pop %v1950
        %v1952 = vmul.f32 %v1889, 1.442695
        %v1953 = vpow.pop %v1952
        %vm1954 = vcmp.ge.f32.partialorder %v1794, 0.0
        %vm1955 = vcmp.ge.f32.partialorder %v1795, 0.0
        %vm1956 = vcmp.ge.f32.partialorder %v1796, 0.0
        %vm1957 = vcmp.ge.f32.partialorder %v1797, 0.0
        %vm1958 = vcmp.ge.f32.partialorder %v1798, 0.0
        %vm1959 = vcmp.ge.f32.partialorder %v1799, 0.0
        %vm1960 = vcmp.ge.f32.partialorder %v1800, 0.0
        %vm1961 = vcmp.ge.f32.partialorder %v1801, 0.0
        %vm1962 = vcmp.ge.f32.partialorder %v1802, 0.0
        %vm1963 = vcmp.ge.f32.partialorder %v1803, 0.0
        %vm1964 = vcmp.ge.f32.partialorder %v1804, 0.0
        %vm1965 = vcmp.ge.f32.partialorder %v1805, 0.0
        %vm1966 = vcmp.ge.f32.partialorder %v1806, 0.0
        %vm1967 = vcmp.ge.f32.partialorder %v1807, 0.0
        %vm1968 = vcmp.ge.f32.partialorder %v1808, 0.0
        %vm1969 = vcmp.ge.f32.partialorder %v1809, 0.0
        %vm1970 = vcmp.ge.f32.partialorder %v1810, 0.0
        %vm1971 = vcmp.ge.f32.partialorder %v1811, 0.0
        %vm1972 = vcmp.ge.f32.partialorder %v1812, 0.0
        %vm1973 = vcmp.ge.f32.partialorder %v1813, 0.0
        %vm1974 = vcmp.ge.f32.partialorder %v1814, 0.0
        %vm1975 = vcmp.ge.f32.partialorder %v1815, 0.0
        %vm1976 = vcmp.ge.f32.partialorder %v1816, 0.0
        %vm1977 = vcmp.ge.f32.partialorder %v1817, 0.0
        %vm1978 = vcmp.ge.f32.partialorder %v1818, 0.0
        %vm1979 = vcmp.ge.f32.partialorder %v1819, 0.0
        %vm1980 = vcmp.ge.f32.partialorder %v1820, 0.0
        %vm1981 = vcmp.ge.f32.partialorder %v1821, 0.0
        %vm1982 = vcmp.ge.f32.partialorder %v1822, 0.0
        %vm1983 = vcmp.ge.f32.partialorder %v1823, 0.0
        %vm1984 = vcmp.ge.f32.partialorder %v1824, 0.0
        %vm1985 = vcmp.ge.f32.partialorder %v1825, 0.0
        %v1986 = vadd.f32 %v1891, 1.0
        %v1987 = vadd.f32 %v1893, 1.0
        %v1988 = vadd.f32 %v1895, 1.0
        %v1989 = vadd.f32 %v1897, 1.0
        %v1990 = vadd.f32 %v1899, 1.0
        %v1991 = vadd.f32 %v1901, 1.0
        %v1992 = vadd.f32 %v1903, 1.0
        %v1993 = vadd.f32 %v1905, 1.0
        %v1994 = vadd.f32 %v1907, 1.0
        %v1995 = vadd.f32 %v1909, 1.0
        %v1996 = vadd.f32 %v1911, 1.0
        %v1997 = vadd.f32 %v1913, 1.0
        %v1998 = vadd.f32 %v1915, 1.0
        %v1999 = vadd.f32 %v1917, 1.0
        %v2000 = vadd.f32 %v1919, 1.0
        %v2001 = vadd.f32 %v1921, 1.0
        %v2002 = vadd.f32 %v1923, 1.0
        %v2003 = vadd.f32 %v1925, 1.0
        %v2004 = vadd.f32 %v1927, 1.0
        %v2005 = vadd.f32 %v1929, 1.0
        %v2006 = vadd.f32 %v1931, 1.0
        %v2007 = vadd.f32 %v1933, 1.0
        %v2008 = vadd.f32 %v1935, 1.0
        %v2009 = vadd.f32 %v1937, 1.0
        %v2010 = vadd.f32 %v1939, 1.0
        %v2011 = vadd.f32 %v1941, 1.0
        %v2012 = vadd.f32 %v1943, 1.0
        %v2013 = vadd.f32 %v1945, 1.0
        %v2014 = vadd.f32 %v1947, 1.0
        %v2015 = vadd.f32 %v1949, 1.0
        %v2016 = vadd.f32 %v1951, 1.0
        %v2017 = vadd.f32 %v1953, 1.0
        %v2018 = vrcp.pop %v1986
        %v2019 = vmul.f32 1.0, %v2018
        %v2020 = vrcp.pop %v1987
        %v2021 = vmul.f32 1.0, %v2020
        %v2022 = vrcp.pop %v1988
        %v2023 = vmul.f32 1.0, %v2022
        %v2024 = vrcp.pop %v1989
        %v2025 = vmul.f32 1.0, %v2024
        %v2026 = vrcp.pop %v1990
        %v2027 = vmul.f32 1.0, %v2026
        %v2028 = vrcp.pop %v1991
        %v2029 = vmul.f32 1.0, %v2028
        %v2030 = vrcp.pop %v1992
        %v2031 = vmul.f32 1.0, %v2030
        %v2032 = vrcp.pop %v1993
        %v2033 = vmul.f32 1.0, %v2032
        %v2034 = vrcp.pop %v1994
        %v2035 = vmul.f32 1.0, %v2034
        %v2036 = vrcp.pop %v1995
        %v2037 = vmul.f32 1.0, %v2036
        %v2038 = vrcp.pop %v1996
        %v2039 = vmul.f32 1.0, %v2038
        %v2040 = vrcp.pop %v1997
        %v2041 = vmul.f32 1.0, %v2040
        %v2042 = vrcp.pop %v1998
        %v2043 = vmul.f32 1.0, %v2042
        %v2044 = vrcp.pop %v1999
        %v2045 = vmul.f32 1.0, %v2044
        %v2046 = vrcp.pop %v2000
        %v2047 = vmul.f32 1.0, %v2046
        %v2048 = vrcp.pop %v2001
        %v2049 = vmul.f32 1.0, %v2048
        %v2050 = vrcp.pop %v2002
        %v2051 = vmul.f32 1.0, %v2050
        %v2052 = vrcp.pop %v2003
        %v2053 = vmul.f32 1.0, %v2052
        %v2054 = vrcp.pop %v2004
        %v2055 = vmul.f32 1.0, %v2054
        %v2056 = vrcp.pop %v2005
        %v2057 = vmul.f32 1.0, %v2056
        %v2058 = vrcp.pop %v2006
        %v2059 = vmul.f32 1.0, %v2058
        %v2060 = vrcp.pop %v2007
        %v2061 = vmul.f32 1.0, %v2060
        %v2062 = vrcp.pop %v2008
        %v2063 = vmul.f32 1.0, %v2062
        %v2064 = vrcp.pop %v2009
        %v2065 = vmul.f32 1.0, %v2064
        %v2066 = vrcp.pop %v2010
        %v2067 = vmul.f32 1.0, %v2066
        %v2068 = vrcp.pop %v2011
        %v2069 = vmul.f32 1.0, %v2068
        %v2070 = vrcp.pop %v2012
        %v2071 = vmul.f32 1.0, %v2070
        %v2072 = vrcp.pop %v2013
        %v2073 = vmul.f32 1.0, %v2072
        %v2074 = vrcp.pop %v2014
        %v2075 = vmul.f32 1.0, %v2074
        %v2076 = vrcp.pop %v2015
        %v2077 = vmul.f32 1.0, %v2076
        %v2078 = vrcp.pop %v2016
        %v2079 = vmul.f32 1.0, %v2078
        %v2080 = vrcp.pop %v2017
        %v2081 = vmul.f32 1.0, %v2080
        %v2082 = vmul.f32 %v1891, %v2018
        %v2083 = vmul.f32 %v1893, %v2020
        %v2084 = vmul.f32 %v1895, %v2022
        %v2085 = vmul.f32 %v1897, %v2024
        %v2086 = vmul.f32 %v1899, %v2026
        %v2087 = vmul.f32 %v1901, %v2028
        %v2088 = vmul.f32 %v1903, %v2030
        %v2089 = vmul.f32 %v1905, %v2032
        %v2090 = vmul.f32 %v1907, %v2034
        %v2091 = vmul.f32 %v1909, %v2036
        %v2092 = vmul.f32 %v1911, %v2038
        %v2093 = vmul.f32 %v1913, %v2040
        %v2094 = vmul.f32 %v1915, %v2042
        %v2095 = vmul.f32 %v1917, %v2044
        %v2096 = vmul.f32 %v1919, %v2046
        %v2097 = vmul.f32 %v1921, %v2048
        %v2098 = vmul.f32 %v1923, %v2050
        %v2099 = vmul.f32 %v1925, %v2052
        %v2100 = vmul.f32 %v1927, %v2054
        %v2101 = vmul.f32 %v1929, %v2056
        %v2102 = vmul.f32 %v1931, %v2058
        %v2103 = vmul.f32 %v1933, %v2060
        %v2104 = vmul.f32 %v1935, %v2062
        %v2105 = vmul.f32 %v1937, %v2064
        %v2106 = vmul.f32 %v1939, %v2066
        %v2107 = vmul.f32 %v1941, %v2068
        %v2108 = vmul.f32 %v1943, %v2070
        %v2109 = vmul.f32 %v1945, %v2072
        %v2110 = vmul.f32 %v1947, %v2074
        %v2111 = vmul.f32 %v1949, %v2076
        %v2112 = vmul.f32 %v1951, %v2078
        %v2113 = vmul.f32 %v1953, %v2080
        %v2114 = vsel %vm1954, %v2019, %v2082
        %v2115 = vsel %vm1955, %v2021, %v2083
        %v2116 = vsel %vm1956, %v2023, %v2084
        %v2117 = vsel %vm1957, %v2025, %v2085
        %v2118 = vsel %vm1958, %v2027, %v2086
        %v2119 = vsel %vm1959, %v2029, %v2087
        %v2120 = vsel %vm1960, %v2031, %v2088
        %v2121 = vsel %vm1961, %v2033, %v2089
        %v2122 = vsel %vm1962, %v2035, %v2090
        %v2123 = vsel %vm1963, %v2037, %v2091
        %v2124 = vsel %vm1964, %v2039, %v2092
        %v2125 = vsel %vm1965, %v2041, %v2093
        %v2126 = vsel %vm1966, %v2043, %v2094
        %v2127 = vsel %vm1967, %v2045, %v2095
        %v2128 = vsel %vm1968, %v2047, %v2096
        %v2129 = vsel %vm1969, %v2049, %v2097
        %v2130 = vsel %vm1970, %v2051, %v2098
        %v2131 = vsel %vm1971, %v2053, %v2099
        %v2132 = vsel %vm1972, %v2055, %v2100
        %v2133 = vsel %vm1973, %v2057, %v2101
        %v2134 = vsel %vm1974, %v2059, %v2102
        %v2135 = vsel %vm1975, %v2061, %v2103
        %v2136 = vsel %vm1976, %v2063, %v2104
        %v2137 = vsel %vm1977, %v2065, %v2105
        %v2138 = vsel %vm1978, %v2067, %v2106
        %v2139 = vsel %vm1979, %v2069, %v2107
        %v2140 = vsel %vm1980, %v2071, %v2108
        %v2141 = vsel %vm1981, %v2073, %v2109
        %v2142 = vsel %vm1982, %v2075, %v2110
        %v2143 = vsel %vm1983, %v2077, %v2111
        %v2144 = vsel %vm1984, %v2079, %v2112
        %v2145 = vsel %vm1985, %v2081, %v2113
        %v2146 = vmul.f32 %v1794, %v2114
        %v2147 = vmul.f32 %v1795, %v2115
        %v2148 = vmul.f32 %v1796, %v2116
        %v2149 = vmul.f32 %v1797, %v2117
        %v2150 = vmul.f32 %v1798, %v2118
        %v2151 = vmul.f32 %v1799, %v2119
        %v2152 = vmul.f32 %v1800, %v2120
        %v2153 = vmul.f32 %v1801, %v2121
        %v2154 = vmul.f32 %v1802, %v2122
        %v2155 = vmul.f32 %v1803, %v2123
        %v2156 = vmul.f32 %v1804, %v2124
        %v2157 = vmul.f32 %v1805, %v2125
        %v2158 = vmul.f32 %v1806, %v2126
        %v2159 = vmul.f32 %v1807, %v2127
        %v2160 = vmul.f32 %v1808, %v2128
        %v2161 = vmul.f32 %v1809, %v2129
        %v2162 = vmul.f32 %v1810, %v2130
        %v2163 = vmul.f32 %v1811, %v2131
        %v2164 = vmul.f32 %v1812, %v2132
        %v2165 = vmul.f32 %v1813, %v2133
        %v2166 = vmul.f32 %v1814, %v2134
        %v2167 = vmul.f32 %v1815, %v2135
        %v2168 = vmul.f32 %v1816, %v2136
        %v2169 = vmul.f32 %v1817, %v2137
        %v2170 = vmul.f32 %v1818, %v2138
        %v2171 = vmul.f32 %v1819, %v2139
        %v2172 = vmul.f32 %v1820, %v2140
        %v2173 = vmul.f32 %v1821, %v2141
        %v2174 = vmul.f32 %v1822, %v2142
        %v2175 = vmul.f32 %v1823, %v2143
        %v2176 = vmul.f32 %v1824, %v2144
        %v2177 = vmul.f32 %v1825, %v2145
        %v2178 = vadd.f32 %v2146, %v2147
        %v2179 = vadd.f32 %v2178, %v2148
        %v2180 = vadd.f32 %v2179, %v2149
        %v2181 = vadd.f32 %v2180, %v2150
        %v2182 = vadd.f32 %v2181, %v2151
        %v2183 = vadd.f32 %v2182, %v2152
        %v2184 = vadd.f32 %v2183, %v2153
        %v2185 = vadd.f32 %v2184, %v2154
        %v2186 = vadd.f32 %v2185, %v2155
        %v2187 = vadd.f32 %v2186, %v2156
        %v2188 = vadd.f32 %v2187, %v2157
        %v2189 = vadd.f32 %v2188, %v2158
        %v2190 = vadd.f32 %v2189, %v2159
        %v2191 = vadd.f32 %v2190, %v2160
        %v2192 = vadd.f32 %v2191, %v2161
        %v2193 = vadd.f32 %v2192, %v2162
        %v2194 = vadd.f32 %v2193, %v2163
        %v2195 = vadd.f32 %v2194, %v2164
        %v2196 = vadd.f32 %v2195, %v2165
        %v2197 = vadd.f32 %v2196, %v2166
        %v2198 = vadd.f32 %v2197, %v2167
        %v2199 = vadd.f32 %v2198, %v2168
        %v2200 = vadd.f32 %v2199, %v2169
        %v2201 = vadd.f32 %v2200, %v2170
        %v2202 = vadd.f32 %v2201, %v2171
        %v2203 = vadd.f32 %v2202, %v2172
        %v2204 = vadd.f32 %v2203, %v2173
        %v2205 = vadd.f32 %v2204, %v2174
        %v2206 = vadd.f32 %v2205, %v2175
        %v2207 = vadd.f32 %v2206, %v2176
        %v2208 = vadd.f32 %v2207, %v2177
        %v2209 = vrot.slane %v2208, 4
        %v2210 = vadd.f32 %v2208, %v2209
        %v2211 = vrot.slane %v2210, 2
        %v2212 = vadd.f32 %v2210, %v2211
        %v2213 = vrot.slane %v2212, 1
        %v2214 = vadd.f32 %v2212, %v2213
        %2215 = vst [vmem:[%s254] sm:$0x1] %v2214
        %2216 = vst [vmem:[%s248] sm:$0xff] %v2146
        %2217 = vst [vmem:[%s248 + $0x8] sm:$0xff] %v2147
        %2218 = vst [vmem:[%s248 + $0x10] sm:$0xff] %v2148
        %2219 = vst [vmem:[%s248 + $0x18] sm:$0xff] %v2149
        %2220 = vst [vmem:[%s248 + $0x20] sm:$0xff] %v2150
        %2221 = vst [vmem:[%s248 + $0x28] sm:$0xff] %v2151
        %2222 = vst [vmem:[%s248 + $0x30] sm:$0xff] %v2152
        %2223 = vst [vmem:[%s248 + $0x38] sm:$0xff] %v2153
        %2224 = vst [vmem:[%s248 + $0x40] sm:$0xff] %v2154
        %2225 = vst [vmem:[%s248 + $0x48] sm:$0xff] %v2155
        %2226 = vst [vmem:[%s248 + $0x50] sm:$0xff] %v2156
        %2227 = vst [vmem:[%s248 + $0x58] sm:$0xff] %v2157
        %2228 = vst [vmem:[%s248 + $0x60] sm:$0xff] %v2158
        %2229 = vst [vmem:[%s248 + $0x68] sm:$0xff] %v2159
        %2230 = vst [vmem:[%s248 + $0x70] sm:$0xff] %v2160
        %2231 = vst [vmem:[%s248 + $0x78] sm:$0xff] %v2161
        %2232 = vst [vmem:[%s248 + $0x80] sm:$0xff] %v2162
        %2233 = vst [vmem:[%s248 + $0x88] sm:$0xff] %v2163
        %2234 = vst [vmem:[%s248 + $0x90] sm:$0xff] %v2164
        %2235 = vst [vmem:[%s248 + $0x98] sm:$0xff] %v2165
        %2236 = vst [vmem:[%s248 + $0xa0] sm:$0xff] %v2166
        %2237 = vst [vmem:[%s248 + $0xa8] sm:$0xff] %v2167
        %2238 = vst [vmem:[%s248 + $0xb0] sm:$0xff] %v2168
        %2239 = vst [vmem:[%s248 + $0xb8] sm:$0xff] %v2169
        %2240 = vst [vmem:[%s248 + $0xc0] sm:$0xff] %v2170
        %2241 = vst [vmem:[%s248 + $0xc8] sm:$0xff] %v2171
        %2242 = vst [vmem:[%s248 + $0xd0] sm:$0xff] %v2172
        %2243 = vst [vmem:[%s248 + $0xd8] sm:$0xff] %v2173
        %2244 = vst [vmem:[%s248 + $0xe0] sm:$0xff] %v2174
        %2245 = vst [vmem:[%s248 + $0xe8] sm:$0xff] %v2175
        %2246 = vst [vmem:[%s248 + $0xf0] sm:$0xff] %v2176
        %2247 = vst [vmem:[%s248 + $0xf8] sm:$0xff] %v2177
        %s2248 = sand.u32 %s142, 1
        %s2249 = scalar_lea.sflag [#allocation4], %s2248
        %s2250 = sand.u32 %s142, 1
        %s2251 = smul.addr %s2250, 256
        %s2252 = scalar_lea.vmem [#allocation3], %s2251
        %s2253 = sand.u32 %s168, 1
        %s2254 = scalar_lea.sflag [#allocation6], %s2253
        %s2255 = sand.u32 %s168, 1
        %s2256 = scalar_lea.vmem [#allocation5], %s2255
        // Predicated region
        $region41: #{tpu_custom_call.1} parent=39 // pred_check
          %p2257 = pneg %p152
        $region42: #{tpu_custom_call.1} parent=39 // pred_check_branch
          %2259 = sbr.rel (%p2257) target = $region44
        $region43: #{tpu_custom_call.1} parent=39 // pred_region
          %s2261 = ssub.s32 4096, 4096
          %2262 = vsyncadd %s2249, %s2261
          %s2263 = smul.addr %s24, 32
          %s2264 = smul.addr %s2263, 128
          %s2265 = scalar_lea.hbm %s5, %s2264
          %s2266 = sshll.u32 %s2252, 4
          %s2267 = int_to_ptr.vmem [resolvable:$true] %s2266
          %2272 = dma.vmem_to_hbm [thread:$0]  %s2267, 4096, %s2265, %s2249, 128, 128, 8
        $region44: #{tpu_custom_call.1} parent=39 // pred_fallthru
          _
        // Predicated region
        $region45: #{tpu_custom_call.1} parent=39 // pred_check
          %p2273 = pneg %p178
        $region46: #{tpu_custom_call.1} parent=39 // pred_check_branch
          %2275 = sbr.rel (%p2273) target = $region48
        $region47: #{tpu_custom_call.1} parent=39 // pred_region
          %s2277 = ssub.s32 16, 16
          %2278 = vsyncadd %s2254, %s2277
          %s2279 = smul.addr %s24, 16
          %s2280 = scalar_lea.hbm %s6, %s2279
          %s2282 = sshll.u32 %s2256, 4
          %s2283 = int_to_ptr.vmem [resolvable:$true] %s2282
          %2285 = dma.vmem_to_hbm [thread:$0]  %s2283, 16, %s2280, %s2254
        $region48: #{tpu_custom_call.1} parent=39 // pred_fallthru
          _
      $region40: #{tpu_custom_call.1} parent=5 // pred_fallthru
        _
      %p2286 = scmp.le.s32.totalorder 2, %s19
      // Predicated region
      $region49: #{tpu_custom_call.1} parent=5 // pred_check
        %p2287 = pneg %p2286
      $region50: #{tpu_custom_call.1} parent=5 // pred_check_branch
        %2289 = sbr.rel (%p2287) target = $region52
      $region51: #{tpu_custom_call.1} parent=5 // pred_region
        %s2290 = ssub.s32 %s19, 2
        // Predicated region
        $region53: #{tpu_custom_call.1} parent=51 // pred_check
          %p2291 = pneg %p158
        $region54: #{tpu_custom_call.1} parent=51 // pred_check_branch
          %2293 = sbr.rel (%p2291) target = $region56
        $region55: #{tpu_custom_call.1} parent=51 // pred_region
          %s2294 = sand.u32 %s143, 1
          %s2295 = scalar_lea.sflag [#allocation4], %s2294
          %s2296 = sand.u32 %s143, 1
          %s2297 = smul.addr %s2296, 256
          %s2298 = scalar_lea.vmem [#allocation3], %s2297
          %2299 = dma.done %s2295, 4096
        $region56: #{tpu_custom_call.1} parent=51 // pred_fallthru
          _
        // Predicated region
        $region57: #{tpu_custom_call.1} parent=51 // pred_check
          %p2300 = pneg %p184
        $region58: #{tpu_custom_call.1} parent=51 // pred_check_branch
          %2302 = sbr.rel (%p2300) target = $region60
        $region59: #{tpu_custom_call.1} parent=51 // pred_region
          %s2303 = sand.u32 %s169, 1
          %s2304 = scalar_lea.sflag [#allocation6], %s2303
          %s2305 = sand.u32 %s169, 1
          %s2306 = scalar_lea.vmem [#allocation5], %s2305
          %2307 = dma.done %s2304, 16
        $region60: #{tpu_custom_call.1} parent=51 // pred_fallthru
          _
      $region52: #{tpu_custom_call.1} parent=5 // pred_fallthru
        _
    $region6: #{tpu_custom_call.1} parent=1 // loop_footer
      %s23 = sadd.s32 1, %s19
    $region7: #{tpu_custom_call.1} parent=1 // loop_footer_branch
      %18 = sbr.rel target = $region3
    $region8: #{tpu_custom_call.1} parent=1 // loop_exit
      _
    %2308 = vsyncpa [#allocation4], 1
    %s2309 = scalar_lea.sflag [#allocation4], 1
    %2310 = vsyncpa %s2309, 1
    %2311 = vsyncpa [#allocation6], 1
    %s2312 = scalar_lea.sflag [#allocation6], 1
    %2313 = vsyncpa %s2312, 1

</llo_original>
